<compile_context>
chip_gen: v6e
topology: v6e:2x2x1
jax: 0.10.0
libtpu: 0.0.40
codegen_flags: <defaults>
</compile_context>

<pallas_src>
import functools

import jax
import jax.numpy as jnp
from jax import lax
from jax.experimental import pallas as pl
from jax.experimental.pallas import tpu as pltpu

LN_EPS = 1e-5  # nn.LayerNorm default


def _layer_norm(x, gamma, beta):
    # x: (S, F); gamma/beta: (1, F).  Matches nn.LayerNorm (biased variance).
    mean = jnp.mean(x, axis=-1, keepdims=True)
    centered = x - mean
    var = jnp.mean(centered * centered, axis=-1, keepdims=True)
    inv = lax.rsqrt(var + LN_EPS)
    return centered * inv * gamma + beta


def _gelu_exact(x):
    # PyTorch nn.GELU() default is the exact erf-based GELU.
    return 0.5 * x * (1.0 + lax.erf(x * 0.7071067811865476))


def _encoder_block_kernel(num_heads, head_dim,
                          x_ref,
                          wq_ref, wk_ref, wv_ref, wo_ref,
                          ln1_g_ref, ln1_b_ref, ln2_g_ref, ln2_b_ref,
                          fcln1_g_ref, fcln1_b_ref, w1_ref, b1_ref,
                          fcln2_g_ref, fcln2_b_ref, w2_ref, b2_ref,
                          o_ref):
    H, D = num_heads, head_dim
    x = x_ref[0]                                   # (S, E) f32
    S, E = x.shape
    bf16 = jnp.bfloat16

    xb = x.astype(bf16)
    xh = jnp.broadcast_to(xb[None], (H, S, E))      # (H, S, E) bf16

    # --- Batched QKV projections (bias=False), H is a leading batch dim ---
    q = jnp.einsum('hse,hed->hsd', xh, wq_ref[...],
                   preferred_element_type=jnp.float32)          # (H, S, D) f32
    k = jnp.einsum('hse,hed->hsd', xh, wk_ref[...],
                   preferred_element_type=jnp.float32)
    v = jnp.einsum('hse,hed->hsd', xh, wv_ref[...],
                   preferred_element_type=jnp.float32)

    q = q * (D ** -0.5)                             # fold scale into q once

    # --- Batched attention (one dot_general for all heads) ---
    logits = jnp.einsum('hqd,hkd->hqk', q.astype(bf16), k.astype(bf16),
                        preferred_element_type=jnp.float32)     # (H, S, S) f32
    m = jnp.max(logits, axis=-1, keepdims=True)
    p = jnp.exp(logits - m)
    inv = pl.reciprocal(jnp.sum(p, axis=-1, keepdims=True), approx=True)
    attn = (p * inv).astype(bf16)

    ctx = jnp.einsum('hqk,hkd->hqd', attn, v.astype(bf16),
                     preferred_element_type=jnp.float32)        # (H, S, D) f32

    # Output projection: sum_h ctx_h @ wo_h  ==  concat(ctx) @ wo
    proj = jnp.einsum('hsd,hde->hse', ctx.astype(bf16), wo_ref[...],
                      preferred_element_type=jnp.float32)       # (H, S, E) f32
    attn_out = jnp.sum(proj, axis=0)                            # (S, E)

    # --- residual + LayerNorm1 (dropout p=0.0 -> identity) ---
    h1 = _layer_norm(x + attn_out, ln1_g_ref[...], ln1_b_ref[...])

    # --- FC block: LN -> Linear(E->Hfc) -> GELU -> LN -> Linear(Hfc->E) ---
    t = _layer_norm(h1, fcln1_g_ref[...], fcln1_b_ref[...])
    t = jnp.dot(t.astype(bf16), w1_ref[...],
                preferred_element_type=jnp.float32) + b1_ref[...]
    t = _gelu_exact(t)
    t = _layer_norm(t, fcln2_g_ref[...], fcln2_b_ref[...])
    fc_out = jnp.dot(t.astype(bf16), w2_ref[...],
                     preferred_element_type=jnp.float32) + b2_ref[...]

    # --- residual + LayerNorm2 (dropout p=0.0 -> identity) ---
    out = _layer_norm(fc_out + h1, ln2_g_ref[...], ln2_b_ref[...])
    o_ref[0] = out.astype(o_ref.dtype)


def encoder_block(x, params, num_heads):
    B, S, E = x.shape
    H = num_heads
    D = E // H
    Hfc = params["w1"].shape[1]
    bf16 = jnp.bfloat16

    # Pre-split attention weights per head so the kernel only issues
    # leading-batch-dim batched matmuls; cast matmul weights to bf16 (halves
    # weight VMEM/DMA).  Biases & LN params stay f32.
    wq_h = params["wq"].reshape(E, H, D).transpose(1, 0, 2).astype(bf16)  # (H, E, D)
    wk_h = params["wk"].reshape(E, H, D).transpose(1, 0, 2).astype(bf16)
    wv_h = params["wv"].reshape(E, H, D).transpose(1, 0, 2).astype(bf16)
    wo_h = params["wo"].reshape(H, D, E).astype(bf16)                     # (H, D, E)
    w1 = params["w1"].astype(bf16)
    w2 = params["w2"].astype(bf16)

    def full(shape):
        return pl.BlockSpec(shape, lambda i, _n=len(shape): (0,) * _n)

    in_specs = [
        pl.BlockSpec((1, S, E), lambda i: (i, 0, 0)),          # x
        full((H, E, D)), full((H, E, D)), full((H, E, D)),     # wq wk wv (per-head)
        full((H, D, E)),                                       # wo (per-head)
        full((1, E)), full((1, E)),                            # ln1 g/b
        full((1, E)), full((1, E)),                            # ln2 g/b
        full((1, E)), full((1, E)),                            # fc ln1 g/b
        full((E, Hfc)), full((1, Hfc)),                        # fc w1/b1
        full((1, Hfc)), full((1, Hfc)),                        # fc ln2 g/b
        full((Hfc, E)), full((1, E)),                          # fc w2/b2
    ]
    out_spec = pl.BlockSpec((1, S, E), lambda i: (i, 0, 0))

    kernel = functools.partial(_encoder_block_kernel, H, D)
    return pl.pallas_call(
        kernel,
        out_shape=jax.ShapeDtypeStruct((B, S, E), x.dtype),
        grid=(B,),
        in_specs=in_specs,
        out_specs=out_spec,
        compiler_params=pltpu.CompilerParams(
            dimension_semantics=("parallel",),
            vmem_limit_bytes=32 * 1024 * 1024),
    )(x,
      wq_h, wk_h, wv_h, wo_h,
      params["ln1_g"], params["ln1_b"], params["ln2_g"], params["ln2_b"],
      params["fcln1_g"], params["fcln1_b"], w1, params["b1"],
      params["fcln2_g"], params["fcln2_b"], w2, params["b2"])


def reference(x, p, num_heads):
    """Plain-JAX f32 reference (mirrors the PyTorch forward)."""
    B, S, E = x.shape
    D = E // num_heads
    hp = lax.Precision.HIGHEST

    def ln(t, g, b):
        m = t.mean(-1, keepdims=True)
        var = ((t - m) ** 2).mean(-1, keepdims=True)
        return (t - m) / jnp.sqrt(var + LN_EPS) * g + b

    q = jnp.dot(x, p["wq"], precision=hp)
    k = jnp.dot(x, p["wk"], precision=hp)
    v = jnp.dot(x, p["wv"], precision=hp)

    def split(t):
        return t.reshape(B, S, num_heads, D).transpose(0, 2, 1, 3)

    qh, kh, vh = split(q), split(k), split(v)
    logits = jnp.einsum("bhqd,bhkd->bhqk", qh, kh, precision=hp) * (D ** -0.5)
    attn = jax.nn.softmax(logits, axis=-1)
    out = jnp.einsum("bhqk,bhkd->bhqd", attn, vh, precision=hp)
    out = out.transpose(0, 2, 1, 3).reshape(B, S, E)
    attn_out = jnp.dot(out, p["wo"], precision=hp)

    h1 = ln(x + attn_out, p["ln1_g"], p["ln1_b"])
    t = ln(h1, p["fcln1_g"], p["fcln1_b"])
    t = jnp.dot(t, p["w1"], precision=hp) + p["b1"]
    t = 0.5 * t * (1.0 + lax.erf(t / jnp.sqrt(2.0)))
    t = ln(t, p["fcln2_g"], p["fcln2_b"])
    fc_out = jnp.dot(t, p["w2"], precision=hp) + p["b2"]
    return ln(fc_out + h1, p["ln2_g"], p["ln2_b"])


def init_params(key, embed_dim, fc_hidden):
    ks = jax.random.split(key, 20)

    def lin_w(k, fan_in, fan_out):
        bound = 1.0 / (fan_in ** 0.5)
        return jax.random.uniform(k, (fan_in, fan_out), jnp.float32, -bound, bound)

    def lin_b(k, fan_in, fan_out):
        bound = 1.0 / (fan_in ** 0.5)
        return jax.random.uniform(k, (1, fan_out), jnp.float32, -bound, bound)

    def ln_gb(kg, kb, f):
        g = jax.random.uniform(kg, (1, f), jnp.float32, 0.5, 1.5)
        b = jax.random.uniform(kb, (1, f), jnp.float32, -0.1, 0.1)
        return g, b

    E, Hfc = embed_dim, fc_hidden
    p = {
        "wq": lin_w(ks[0], E, E), "wk": lin_w(ks[1], E, E),
        "wv": lin_w(ks[2], E, E), "wo": lin_w(ks[3], E, E),
        "w1": lin_w(ks[4], E, Hfc), "b1": lin_b(ks[5], E, Hfc),
        "w2": lin_w(ks[6], Hfc, E), "b2": lin_b(ks[7], Hfc, E),
    }
    p["ln1_g"], p["ln1_b"] = ln_gb(ks[8], ks[9], E)
    p["ln2_g"], p["ln2_b"] = ln_gb(ks[10], ks[11], E)
    p["fcln1_g"], p["fcln1_b"] = ln_gb(ks[12], ks[13], E)
    p["fcln2_g"], p["fcln2_b"] = ln_gb(ks[14], ks[15], Hfc)
    return p


if __name__ == "__main__":
    B, S, E = 2, 8, 32
    num_heads = 4
    fc_hidden = 4 * E  # fc_hidden_dims=None -> 4 * embed_dim

    key = jax.random.PRNGKey(0)
    k_x, k_p = jax.random.split(key)
    x = jax.random.normal(k_x, (B, S, E), dtype=jnp.float32)
    params = init_params(k_p, E, fc_hidden)

    out = encoder_block(x, params, num_heads)
    out = jax.block_until_ready(out)

    ref = jax.block_until_ready(reference(x, params, num_heads))
    assert out.shape == (B, S, E)
    # Kernel intentionally runs the MXU with bf16 inputs (f32 accumulation);
    # tolerance is set accordingly vs. the f32 HIGHEST-precision reference.
    max_diff = float(jnp.max(jnp.abs(out - ref)))
    assert jnp.allclose(out, ref, atol=3e-2, rtol=3e-2), (
        "max abs diff %f" % max_diff)

    print("KERNEL_OK")
</pallas_src>

<mosaic_0001>
module attributes {stable_mosaic.version = 11 : i64} {
  func.func @_encoder_block_kernel(%arg0: i32, %arg1: memref<1x8x32xf32, #tpu.memory_space<vmem>>, %arg2: memref<4x32x8xbf16, #tpu.memory_space<vmem>>, %arg3: memref<4x32x8xbf16, #tpu.memory_space<vmem>>, %arg4: memref<4x32x8xbf16, #tpu.memory_space<vmem>>, %arg5: memref<4x8x32xbf16, #tpu.memory_space<vmem>>, %arg6: memref<1x32xf32, #tpu.memory_space<vmem>>, %arg7: memref<1x32xf32, #tpu.memory_space<vmem>>, %arg8: memref<1x32xf32, #tpu.memory_space<vmem>>, %arg9: memref<1x32xf32, #tpu.memory_space<vmem>>, %arg10: memref<1x32xf32, #tpu.memory_space<vmem>>, %arg11: memref<1x32xf32, #tpu.memory_space<vmem>>, %arg12: memref<32x128xbf16, #tpu.memory_space<vmem>>, %arg13: memref<1x128xf32, #tpu.memory_space<vmem>>, %arg14: memref<1x128xf32, #tpu.memory_space<vmem>>, %arg15: memref<1x128xf32, #tpu.memory_space<vmem>>, %arg16: memref<128x32xbf16, #tpu.memory_space<vmem>>, %arg17: memref<1x32xf32, #tpu.memory_space<vmem>>, %arg18: memref<1x8x32xf32, #tpu.memory_space<vmem>>) attributes {dimension_semantics = [#tpu.dimension_semantics<parallel>], iteration_bounds = array<i64: 2>, scalar_prefetch = 0 : i64, scratch_operands = 0 : i64, tpu.core_type = #tpu.core_type<tc>, window_params = [{transform_indices = @transform_0, window_bounds = array<i64: 1, 8, 32>}, {pipeline_mode = #tpu.pipeline_mode<synchronous>, transform_indices = @transform_1, window_bounds = array<i64: 4, 32, 8>}, {pipeline_mode = #tpu.pipeline_mode<synchronous>, transform_indices = @transform_2, window_bounds = array<i64: 4, 32, 8>}, {pipeline_mode = #tpu.pipeline_mode<synchronous>, transform_indices = @transform_3, window_bounds = array<i64: 4, 32, 8>}, {pipeline_mode = #tpu.pipeline_mode<synchronous>, transform_indices = @transform_4, window_bounds = array<i64: 4, 8, 32>}, {pipeline_mode = #tpu.pipeline_mode<synchronous>, transform_indices = @transform_5, window_bounds = array<i64: 1, 32>}, {pipeline_mode = #tpu.pipeline_mode<synchronous>, transform_indices = @transform_6, window_bounds = array<i64: 1, 32>}, {pipeline_mode = #tpu.pipeline_mode<synchronous>, transform_indices = @transform_7, window_bounds = array<i64: 1, 32>}, {pipeline_mode = #tpu.pipeline_mode<synchronous>, transform_indices = @transform_8, window_bounds = array<i64: 1, 32>}, {pipeline_mode = #tpu.pipeline_mode<synchronous>, transform_indices = @transform_9, window_bounds = array<i64: 1, 32>}, {pipeline_mode = #tpu.pipeline_mode<synchronous>, transform_indices = @transform_10, window_bounds = array<i64: 1, 32>}, {pipeline_mode = #tpu.pipeline_mode<synchronous>, transform_indices = @transform_11, window_bounds = array<i64: 32, 128>}, {pipeline_mode = #tpu.pipeline_mode<synchronous>, transform_indices = @transform_12, window_bounds = array<i64: 1, 128>}, {pipeline_mode = #tpu.pipeline_mode<synchronous>, transform_indices = @transform_13, window_bounds = array<i64: 1, 128>}, {pipeline_mode = #tpu.pipeline_mode<synchronous>, transform_indices = @transform_14, window_bounds = array<i64: 1, 128>}, {pipeline_mode = #tpu.pipeline_mode<synchronous>, transform_indices = @transform_15, window_bounds = array<i64: 128, 32>}, {pipeline_mode = #tpu.pipeline_mode<synchronous>, transform_indices = @transform_16, window_bounds = array<i64: 1, 32>}, {transform_indices = @transform_17, window_bounds = array<i64: 1, 8, 32>}]} {
    %c0 = arith.constant 0 : index
    %c0_0 = arith.constant 0 : index
    %c0_1 = arith.constant 0 : index
    %0 = vector.load %arg1[%c0, %c0_0, %c0_1] : memref<1x8x32xf32, #tpu.memory_space<vmem>>, vector<1x8x32xf32>
    %1 = vector.shape_cast %0 : vector<1x8x32xf32> to vector<8x32xf32>
    %2 = arith.truncf %1 : vector<8x32xf32> to vector<8x32xbf16>
    %3 = vector.shape_cast %2 : vector<8x32xbf16> to vector<1x8x32xbf16>
    %4 = vector.shape_cast %3 : vector<1x8x32xbf16> to vector<1x8x32xbf16>
    %5 = vector.broadcast %4 : vector<1x8x32xbf16> to vector<4x8x32xbf16>
    %c0_2 = arith.constant 0 : index
    %c0_3 = arith.constant 0 : index
    %c0_4 = arith.constant 0 : index
    %6 = vector.load %arg2[%c0_2, %c0_3, %c0_4] : memref<4x32x8xbf16, #tpu.memory_space<vmem>>, vector<4x32x8xbf16>
    "tpu.trace_start"() <{level = 10 : i32, message = "hse,hed->hsd"}> : () -> ()
    %cst = arith.constant dense<0.000000e+00> : vector<4x8x8xf32>
    %7 = tpu.matmul %5, %6, %cst {dimension_numbers = #tpu.dot_dimension_numbers<[2], [1], [1], [2], [0, 0, 0, 1, 1, 2], [0], [0]>} : vector<4x8x32xbf16>, vector<4x32x8xbf16>, vector<4x8x8xf32> -> vector<4x8x8xf32>
    "tpu.trace_stop"() : () -> ()
    %c0_5 = arith.constant 0 : index
    %c0_6 = arith.constant 0 : index
    %c0_7 = arith.constant 0 : index
    %8 = vector.load %arg3[%c0_5, %c0_6, %c0_7] : memref<4x32x8xbf16, #tpu.memory_space<vmem>>, vector<4x32x8xbf16>
    "tpu.trace_start"() <{level = 10 : i32, message = "hse,hed->hsd"}> : () -> ()
    %cst_8 = arith.constant dense<0.000000e+00> : vector<4x8x8xf32>
    %9 = tpu.matmul %5, %8, %cst_8 {dimension_numbers = #tpu.dot_dimension_numbers<[2], [1], [1], [2], [0, 0, 0, 1, 1, 2], [0], [0]>} : vector<4x8x32xbf16>, vector<4x32x8xbf16>, vector<4x8x8xf32> -> vector<4x8x8xf32>
    "tpu.trace_stop"() : () -> ()
    %c0_9 = arith.constant 0 : index
    %c0_10 = arith.constant 0 : index
    %c0_11 = arith.constant 0 : index
    %10 = vector.load %arg4[%c0_9, %c0_10, %c0_11] : memref<4x32x8xbf16, #tpu.memory_space<vmem>>, vector<4x32x8xbf16>
    "tpu.trace_start"() <{level = 10 : i32, message = "hse,hed->hsd"}> : () -> ()
    %cst_12 = arith.constant dense<0.000000e+00> : vector<4x8x8xf32>
    %11 = tpu.matmul %5, %10, %cst_12 {dimension_numbers = #tpu.dot_dimension_numbers<[2], [1], [1], [2], [0, 0, 0, 1, 1, 2], [0], [0]>} : vector<4x8x32xbf16>, vector<4x32x8xbf16>, vector<4x8x8xf32> -> vector<4x8x8xf32>
    "tpu.trace_stop"() : () -> ()
    %cst_13 = arith.constant 0.353553385 : f32
    %12 = vector.broadcast %cst_13 : f32 to vector<4x8x8xf32>
    %13 = arith.mulf %7, %12 : vector<4x8x8xf32>
    %14 = arith.truncf %13 : vector<4x8x8xf32> to vector<4x8x8xbf16>
    %15 = arith.truncf %9 : vector<4x8x8xf32> to vector<4x8x8xbf16>
    "tpu.trace_start"() <{level = 10 : i32, message = "hqd,hkd->hqk"}> : () -> ()
    %cst_14 = arith.constant dense<0.000000e+00> : vector<4x8x8xf32>
    %16 = tpu.matmul %14, %15, %cst_14 {dimension_numbers = #tpu.dot_dimension_numbers<[2], [2], [1], [1], [0, 0, 0, 1, 1, 1], [0], [0]>} : vector<4x8x8xbf16>, vector<4x8x8xbf16>, vector<4x8x8xf32> -> vector<4x8x8xf32>
    "tpu.trace_stop"() : () -> ()
    %cst_15 = arith.constant dense<0xFF800000> : vector<4x8xf32>
    %17 = vector.multi_reduction <maximumf>, %16, %cst_15 [2] : vector<4x8x8xf32> to vector<4x8xf32>
    %18 = vector.shape_cast %17 : vector<4x8xf32> to vector<4x8x1xf32>
    %19 = vector.broadcast %18 : vector<4x8x1xf32> to vector<4x8x8xf32>
    %20 = arith.subf %16, %19 : vector<4x8x8xf32>
    %21 = math.exp %20 : vector<4x8x8xf32>
    %cst_16 = arith.constant dense<0.000000e+00> : vector<4x8xf32>
    %22 = vector.multi_reduction <add>, %21, %cst_16 [2] : vector<4x8x8xf32> to vector<4x8xf32>
    %23 = vector.shape_cast %22 : vector<4x8xf32> to vector<4x8x1xf32>
    %24 = tpu.reciprocal %23 {approx = true} : vector<4x8x1xf32> -> vector<4x8x1xf32>
    %25 = vector.broadcast %24 : vector<4x8x1xf32> to vector<4x8x8xf32>
    %26 = arith.mulf %21, %25 : vector<4x8x8xf32>
    %27 = arith.truncf %26 : vector<4x8x8xf32> to vector<4x8x8xbf16>
    %28 = arith.truncf %11 : vector<4x8x8xf32> to vector<4x8x8xbf16>
    "tpu.trace_start"() <{level = 10 : i32, message = "hqk,hkd->hqd"}> : () -> ()
    %cst_17 = arith.constant dense<0.000000e+00> : vector<4x8x8xf32>
    %29 = tpu.matmul %27, %28, %cst_17 {dimension_numbers = #tpu.dot_dimension_numbers<[2], [1], [1], [2], [0, 0, 0, 1, 1, 2], [0], [0]>} : vector<4x8x8xbf16>, vector<4x8x8xbf16>, vector<4x8x8xf32> -> vector<4x8x8xf32>
    "tpu.trace_stop"() : () -> ()
    %30 = arith.truncf %29 : vector<4x8x8xf32> to vector<4x8x8xbf16>
    %c0_18 = arith.constant 0 : index
    %c0_19 = arith.constant 0 : index
    %c0_20 = arith.constant 0 : index
    %31 = vector.load %arg5[%c0_18, %c0_19, %c0_20] : memref<4x8x32xbf16, #tpu.memory_space<vmem>>, vector<4x8x32xbf16>
    "tpu.trace_start"() <{level = 10 : i32, message = "hsd,hde->hse"}> : () -> ()
    %cst_21 = arith.constant dense<0.000000e+00> : vector<4x8x32xf32>
    %32 = tpu.matmul %30, %31, %cst_21 {dimension_numbers = #tpu.dot_dimension_numbers<[2], [1], [1], [2], [0, 0, 0, 1, 1, 2], [0], [0]>} : vector<4x8x8xbf16>, vector<4x8x32xbf16>, vector<4x8x32xf32> -> vector<4x8x32xf32>
    "tpu.trace_stop"() : () -> ()
    %cst_22 = arith.constant dense<0.000000e+00> : vector<8x32xf32>
    %33 = vector.multi_reduction <add>, %32, %cst_22 [0] : vector<4x8x32xf32> to vector<8x32xf32>
    %34 = arith.addf %1, %33 : vector<8x32xf32>
    %c0_23 = arith.constant 0 : index
    %c0_24 = arith.constant 0 : index
    %35 = vector.load %arg6[%c0_23, %c0_24] : memref<1x32xf32, #tpu.memory_space<vmem>>, vector<1x32xf32>
    %c0_25 = arith.constant 0 : index
    %c0_26 = arith.constant 0 : index
    %36 = vector.load %arg7[%c0_25, %c0_26] : memref<1x32xf32, #tpu.memory_space<vmem>>, vector<1x32xf32>
    %cst_27 = arith.constant dense<0.000000e+00> : vector<8xf32>
    %37 = vector.multi_reduction <add>, %34, %cst_27 [1] : vector<8x32xf32> to vector<8xf32>
    %38 = vector.shape_cast %37 : vector<8xf32> to vector<8x1xf32>
    %cst_28 = arith.constant 3.200000e+01 : f32
    %39 = vector.broadcast %cst_28 : f32 to vector<8x1xf32>
    %40 = arith.divf %38, %39 : vector<8x1xf32>
    %41 = vector.broadcast %40 : vector<8x1xf32> to vector<8x32xf32>
    %42 = arith.subf %34, %41 : vector<8x32xf32>
    %43 = arith.mulf %42, %42 : vector<8x32xf32>
    %cst_29 = arith.constant dense<0.000000e+00> : vector<8xf32>
    %44 = vector.multi_reduction <add>, %43, %cst_29 [1] : vector<8x32xf32> to vector<8xf32>
    %45 = vector.shape_cast %44 : vector<8xf32> to vector<8x1xf32>
    %cst_30 = arith.constant 3.200000e+01 : f32
    %46 = vector.broadcast %cst_30 : f32 to vector<8x1xf32>
    %47 = arith.divf %45, %46 : vector<8x1xf32>
    %cst_31 = arith.constant 9.99999974E-6 : f32
    %48 = vector.broadcast %cst_31 : f32 to vector<8x1xf32>
    %49 = arith.addf %47, %48 : vector<8x1xf32>
    %50 = math.rsqrt %49 : vector<8x1xf32>
    %51 = vector.broadcast %50 : vector<8x1xf32> to vector<8x32xf32>
    %52 = arith.mulf %42, %51 : vector<8x32xf32>
    %53 = vector.broadcast %35 : vector<1x32xf32> to vector<8x32xf32>
    %54 = arith.mulf %52, %53 : vector<8x32xf32>
    %55 = vector.broadcast %36 : vector<1x32xf32> to vector<8x32xf32>
    %56 = arith.addf %54, %55 : vector<8x32xf32>
    %c0_32 = arith.constant 0 : index
    %c0_33 = arith.constant 0 : index
    %57 = vector.load %arg10[%c0_32, %c0_33] : memref<1x32xf32, #tpu.memory_space<vmem>>, vector<1x32xf32>
    %c0_34 = arith.constant 0 : index
    %c0_35 = arith.constant 0 : index
    %58 = vector.load %arg11[%c0_34, %c0_35] : memref<1x32xf32, #tpu.memory_space<vmem>>, vector<1x32xf32>
    %cst_36 = arith.constant dense<0.000000e+00> : vector<8xf32>
    %59 = vector.multi_reduction <add>, %56, %cst_36 [1] : vector<8x32xf32> to vector<8xf32>
    %60 = vector.shape_cast %59 : vector<8xf32> to vector<8x1xf32>
    %cst_37 = arith.constant 3.200000e+01 : f32
    %61 = vector.broadcast %cst_37 : f32 to vector<8x1xf32>
    %62 = arith.divf %60, %61 : vector<8x1xf32>
    %63 = vector.broadcast %62 : vector<8x1xf32> to vector<8x32xf32>
    %64 = arith.subf %56, %63 : vector<8x32xf32>
    %65 = arith.mulf %64, %64 : vector<8x32xf32>
    %cst_38 = arith.constant dense<0.000000e+00> : vector<8xf32>
    %66 = vector.multi_reduction <add>, %65, %cst_38 [1] : vector<8x32xf32> to vector<8xf32>
    %67 = vector.shape_cast %66 : vector<8xf32> to vector<8x1xf32>
    %cst_39 = arith.constant 3.200000e+01 : f32
    %68 = vector.broadcast %cst_39 : f32 to vector<8x1xf32>
    %69 = arith.divf %67, %68 : vector<8x1xf32>
    %cst_40 = arith.constant 9.99999974E-6 : f32
    %70 = vector.broadcast %cst_40 : f32 to vector<8x1xf32>
    %71 = arith.addf %69, %70 : vector<8x1xf32>
    %72 = math.rsqrt %71 : vector<8x1xf32>
    %73 = vector.broadcast %72 : vector<8x1xf32> to vector<8x32xf32>
    %74 = arith.mulf %64, %73 : vector<8x32xf32>
    %75 = vector.broadcast %57 : vector<1x32xf32> to vector<8x32xf32>
    %76 = arith.mulf %74, %75 : vector<8x32xf32>
    %77 = vector.broadcast %58 : vector<1x32xf32> to vector<8x32xf32>
    %78 = arith.addf %76, %77 : vector<8x32xf32>
    %79 = arith.truncf %78 : vector<8x32xf32> to vector<8x32xbf16>
    %c0_41 = arith.constant 0 : index
    %c0_42 = arith.constant 0 : index
    %80 = vector.load %arg12[%c0_41, %c0_42] : memref<32x128xbf16, #tpu.memory_space<vmem>>, vector<32x128xbf16>
    %cst_43 = arith.constant dense<0.000000e+00> : vector<8x128xf32>
    %81 = tpu.matmul %79, %80, %cst_43 {dimension_numbers = #tpu.dot_dimension_numbers<[1], [0], [0], [1], [0, 0, 1, 1], [], []>} : vector<8x32xbf16>, vector<32x128xbf16>, vector<8x128xf32> -> vector<8x128xf32>
    %c0_44 = arith.constant 0 : index
    %c0_45 = arith.constant 0 : index
    %82 = vector.load %arg13[%c0_44, %c0_45] : memref<1x128xf32, #tpu.memory_space<vmem>>, vector<1x128xf32>
    %83 = vector.broadcast %82 : vector<1x128xf32> to vector<8x128xf32>
    %84 = arith.addf %81, %83 : vector<8x128xf32>
    %cst_46 = arith.constant 5.000000e-01 : f32
    %85 = vector.broadcast %cst_46 : f32 to vector<8x128xf32>
    %86 = arith.mulf %85, %84 : vector<8x128xf32>
    %cst_47 = arith.constant 0.707106769 : f32
    %87 = vector.broadcast %cst_47 : f32 to vector<8x128xf32>
    %88 = arith.mulf %84, %87 : vector<8x128xf32>
    %89 = math.erf %88 : vector<8x128xf32>
    %cst_48 = arith.constant 1.000000e+00 : f32
    %90 = vector.broadcast %cst_48 : f32 to vector<8x128xf32>
    %91 = arith.addf %90, %89 : vector<8x128xf32>
    %92 = arith.mulf %86, %91 : vector<8x128xf32>
    %c0_49 = arith.constant 0 : index
    %c0_50 = arith.constant 0 : index
    %93 = vector.load %arg14[%c0_49, %c0_50] : memref<1x128xf32, #tpu.memory_space<vmem>>, vector<1x128xf32>
    %c0_51 = arith.constant 0 : index
    %c0_52 = arith.constant 0 : index
    %94 = vector.load %arg15[%c0_51, %c0_52] : memref<1x128xf32, #tpu.memory_space<vmem>>, vector<1x128xf32>
    %cst_53 = arith.constant dense<0.000000e+00> : vector<8xf32>
    %95 = vector.multi_reduction <add>, %92, %cst_53 [1] : vector<8x128xf32> to vector<8xf32>
    %96 = vector.shape_cast %95 : vector<8xf32> to vector<8x1xf32>
    %cst_54 = arith.constant 1.280000e+02 : f32
    %97 = vector.broadcast %cst_54 : f32 to vector<8x1xf32>
    %98 = arith.divf %96, %97 : vector<8x1xf32>
    %99 = vector.broadcast %98 : vector<8x1xf32> to vector<8x128xf32>
    %100 = arith.subf %92, %99 : vector<8x128xf32>
    %101 = arith.mulf %100, %100 : vector<8x128xf32>
    %cst_55 = arith.constant dense<0.000000e+00> : vector<8xf32>
    %102 = vector.multi_reduction <add>, %101, %cst_55 [1] : vector<8x128xf32> to vector<8xf32>
    %103 = vector.shape_cast %102 : vector<8xf32> to vector<8x1xf32>
    %cst_56 = arith.constant 1.280000e+02 : f32
    %104 = vector.broadcast %cst_56 : f32 to vector<8x1xf32>
    %105 = arith.divf %103, %104 : vector<8x1xf32>
    %cst_57 = arith.constant 9.99999974E-6 : f32
    %106 = vector.broadcast %cst_57 : f32 to vector<8x1xf32>
    %107 = arith.addf %105, %106 : vector<8x1xf32>
    %108 = math.rsqrt %107 : vector<8x1xf32>
    %109 = vector.broadcast %108 : vector<8x1xf32> to vector<8x128xf32>
    %110 = arith.mulf %100, %109 : vector<8x128xf32>
    %111 = vector.broadcast %93 : vector<1x128xf32> to vector<8x128xf32>
    %112 = arith.mulf %110, %111 : vector<8x128xf32>
    %113 = vector.broadcast %94 : vector<1x128xf32> to vector<8x128xf32>
    %114 = arith.addf %112, %113 : vector<8x128xf32>
    %115 = arith.truncf %114 : vector<8x128xf32> to vector<8x128xbf16>
    %c0_58 = arith.constant 0 : index
    %c0_59 = arith.constant 0 : index
    %116 = vector.load %arg16[%c0_58, %c0_59] : memref<128x32xbf16, #tpu.memory_space<vmem>>, vector<128x32xbf16>
    %cst_60 = arith.constant dense<0.000000e+00> : vector<8x32xf32>
    %117 = tpu.matmul %115, %116, %cst_60 {dimension_numbers = #tpu.dot_dimension_numbers<[1], [0], [0], [1], [0, 0, 1, 1], [], []>} : vector<8x128xbf16>, vector<128x32xbf16>, vector<8x32xf32> -> vector<8x32xf32>
    %c0_61 = arith.constant 0 : index
    %c0_62 = arith.constant 0 : index
    %118 = vector.load %arg17[%c0_61, %c0_62] : memref<1x32xf32, #tpu.memory_space<vmem>>, vector<1x32xf32>
    %119 = vector.broadcast %118 : vector<1x32xf32> to vector<8x32xf32>
    %120 = arith.addf %117, %119 : vector<8x32xf32>
    %121 = arith.addf %120, %56 : vector<8x32xf32>
    %c0_63 = arith.constant 0 : index
    %c0_64 = arith.constant 0 : index
    %122 = vector.load %arg8[%c0_63, %c0_64] : memref<1x32xf32, #tpu.memory_space<vmem>>, vector<1x32xf32>
    %c0_65 = arith.constant 0 : index
    %c0_66 = arith.constant 0 : index
    %123 = vector.load %arg9[%c0_65, %c0_66] : memref<1x32xf32, #tpu.memory_space<vmem>>, vector<1x32xf32>
    %cst_67 = arith.constant dense<0.000000e+00> : vector<8xf32>
    %124 = vector.multi_reduction <add>, %121, %cst_67 [1] : vector<8x32xf32> to vector<8xf32>
    %125 = vector.shape_cast %124 : vector<8xf32> to vector<8x1xf32>
    %cst_68 = arith.constant 3.200000e+01 : f32
    %126 = vector.broadcast %cst_68 : f32 to vector<8x1xf32>
    %127 = arith.divf %125, %126 : vector<8x1xf32>
    %128 = vector.broadcast %127 : vector<8x1xf32> to vector<8x32xf32>
    %129 = arith.subf %121, %128 : vector<8x32xf32>
    %130 = arith.mulf %129, %129 : vector<8x32xf32>
    %cst_69 = arith.constant dense<0.000000e+00> : vector<8xf32>
    %131 = vector.multi_reduction <add>, %130, %cst_69 [1] : vector<8x32xf32> to vector<8xf32>
    %132 = vector.shape_cast %131 : vector<8xf32> to vector<8x1xf32>
    %cst_70 = arith.constant 3.200000e+01 : f32
    %133 = vector.broadcast %cst_70 : f32 to vector<8x1xf32>
    %134 = arith.divf %132, %133 : vector<8x1xf32>
    %cst_71 = arith.constant 9.99999974E-6 : f32
    %135 = vector.broadcast %cst_71 : f32 to vector<8x1xf32>
    %136 = arith.addf %134, %135 : vector<8x1xf32>
    %137 = math.rsqrt %136 : vector<8x1xf32>
    %138 = vector.broadcast %137 : vector<8x1xf32> to vector<8x32xf32>
    %139 = arith.mulf %129, %138 : vector<8x32xf32>
    %140 = vector.broadcast %122 : vector<1x32xf32> to vector<8x32xf32>
    %141 = arith.mulf %139, %140 : vector<8x32xf32>
    %142 = vector.broadcast %123 : vector<1x32xf32> to vector<8x32xf32>
    %143 = arith.addf %141, %142 : vector<8x32xf32>
    %c0_72 = arith.constant 0 : index
    %c0_73 = arith.constant 0 : index
    %c0_74 = arith.constant 0 : index
    %144 = vector.load %arg18[%c0_72, %c0_73, %c0_74] : memref<1x8x32xf32, #tpu.memory_space<vmem>>, vector<1x8x32xf32>
    %145 = vector.shape_cast %144 : vector<1x8x32xf32> to vector<8x32xf32>
    %146 = vector.shape_cast %143 : vector<8x32xf32> to vector<1x8x32xf32>
    tpu.vector_store %arg18[%c0_72, %c0_73, %c0_74], %146 {strides = array<i32>} : memref<1x8x32xf32, #tpu.memory_space<vmem>>, vector<1x8x32xf32>,
    return
  }
  func.func @transform_0(%arg0: i32) -> (i32, i32, i32) {
    %c0_i32 = arith.constant 0 : i32
    %c0_i32_0 = arith.constant 0 : i32
    %c0_i32_1 = arith.constant 0 : i32
    return %arg0, %c0_i32, %c0_i32_0 : i32, i32, i32
  }
  func.func @transform_1(%arg0: i32) -> (i32, i32, i32) {
    %c0_i32 = arith.constant 0 : i32
    %c0_i32_0 = arith.constant 0 : i32
    %c0_i32_1 = arith.constant 0 : i32
    %c0_i32_2 = arith.constant 0 : i32
    return %c0_i32, %c0_i32_0, %c0_i32_1 : i32, i32, i32
  }
  func.func @transform_2(%arg0: i32) -> (i32, i32, i32) {
    %c0_i32 = arith.constant 0 : i32
    %c0_i32_0 = arith.constant 0 : i32
    %c0_i32_1 = arith.constant 0 : i32
    %c0_i32_2 = arith.constant 0 : i32
    return %c0_i32, %c0_i32_0, %c0_i32_1 : i32, i32, i32
  }
  func.func @transform_3(%arg0: i32) -> (i32, i32, i32) {
    %c0_i32 = arith.constant 0 : i32
    %c0_i32_0 = arith.constant 0 : i32
    %c0_i32_1 = arith.constant 0 : i32
    %c0_i32_2 = arith.constant 0 : i32
    return %c0_i32, %c0_i32_0, %c0_i32_1 : i32, i32, i32
  }
  func.func @transform_4(%arg0: i32) -> (i32, i32, i32) {
    %c0_i32 = arith.constant 0 : i32
    %c0_i32_0 = arith.constant 0 : i32
    %c0_i32_1 = arith.constant 0 : i32
    %c0_i32_2 = arith.constant 0 : i32
    return %c0_i32, %c0_i32_0, %c0_i32_1 : i32, i32, i32
  }
  func.func @transform_5(%arg0: i32) -> (i32, i32) {
    %c0_i32 = arith.constant 0 : i32
    %c0_i32_0 = arith.constant 0 : i32
    %c0_i32_1 = arith.constant 0 : i32
    return %c0_i32, %c0_i32_0 : i32, i32
  }
  func.func @transform_6(%arg0: i32) -> (i32, i32) {
    %c0_i32 = arith.constant 0 : i32
    %c0_i32_0 = arith.constant 0 : i32
    %c0_i32_1 = arith.constant 0 : i32
    return %c0_i32, %c0_i32_0 : i32, i32
  }
  func.func @transform_7(%arg0: i32) -> (i32, i32) {
    %c0_i32 = arith.constant 0 : i32
    %c0_i32_0 = arith.constant 0 : i32
    %c0_i32_1 = arith.constant 0 : i32
    return %c0_i32, %c0_i32_0 : i32, i32
  }
  func.func @transform_8(%arg0: i32) -> (i32, i32) {
    %c0_i32 = arith.constant 0 : i32
    %c0_i32_0 = arith.constant 0 : i32
    %c0_i32_1 = arith.constant 0 : i32
    return %c0_i32, %c0_i32_0 : i32, i32
  }
  func.func @transform_9(%arg0: i32) -> (i32, i32) {
    %c0_i32 = arith.constant 0 : i32
    %c0_i32_0 = arith.constant 0 : i32
    %c0_i32_1 = arith.constant 0 : i32
    return %c0_i32, %c0_i32_0 : i32, i32
  }
  func.func @transform_10(%arg0: i32) -> (i32, i32) {
    %c0_i32 = arith.constant 0 : i32
    %c0_i32_0 = arith.constant 0 : i32
    %c0_i32_1 = arith.constant 0 : i32
    return %c0_i32, %c0_i32_0 : i32, i32
  }
  func.func @transform_11(%arg0: i32) -> (i32, i32) {
    %c0_i32 = arith.constant 0 : i32
    %c0_i32_0 = arith.constant 0 : i32
    %c0_i32_1 = arith.constant 0 : i32
    return %c0_i32, %c0_i32_0 : i32, i32
  }
  func.func @transform_12(%arg0: i32) -> (i32, i32) {
    %c0_i32 = arith.constant 0 : i32
    %c0_i32_0 = arith.constant 0 : i32
    %c0_i32_1 = arith.constant 0 : i32
    return %c0_i32, %c0_i32_0 : i32, i32
  }
  func.func @transform_13(%arg0: i32) -> (i32, i32) {
    %c0_i32 = arith.constant 0 : i32
    %c0_i32_0 = arith.constant 0 : i32
    %c0_i32_1 = arith.constant 0 : i32
    return %c0_i32, %c0_i32_0 : i32, i32
  }
  func.func @transform_14(%arg0: i32) -> (i32, i32) {
    %c0_i32 = arith.constant 0 : i32
    %c0_i32_0 = arith.constant 0 : i32
    %c0_i32_1 = arith.constant 0 : i32
    return %c0_i32, %c0_i32_0 : i32, i32
  }
  func.func @transform_15(%arg0: i32) -> (i32, i32) {
    %c0_i32 = arith.constant 0 : i32
    %c0_i32_0 = arith.constant 0 : i32
    %c0_i32_1 = arith.constant 0 : i32
    return %c0_i32, %c0_i32_0 : i32, i32
  }
  func.func @transform_16(%arg0: i32) -> (i32, i32) {
    %c0_i32 = arith.constant 0 : i32
    %c0_i32_0 = arith.constant 0 : i32
    %c0_i32_1 = arith.constant 0 : i32
    return %c0_i32, %c0_i32_0 : i32, i32
  }
  func.func @transform_17(%arg0: i32) -> (i32, i32, i32) {
    %c0_i32 = arith.constant 0 : i32
    %c0_i32_0 = arith.constant 0 : i32
    %c0_i32_1 = arith.constant 0 : i32
    return %arg0, %c0_i32, %c0_i32_0 : i32, i32, i32
  }
}

</mosaic_0001>

<llo_original>
// kernel: tpu_custom_call.1
$region0: #{tpu_custom_call.1}
  #allocation0 [shape = 'u32[]', space=smem, size = 0x4, offset = 0x4, fixed_abs, tag = 'smem constant byte address 0x4 - core index']
  #allocation1 [shape = 'u32[144,128]{1,0:T(1,128)}', space=vmem, size = 0x12000, scoped, tag = 'internal scratch']
  %s0 = inlined_call_operand.vmem [shape: f32[2,8,32], index: 0, kind: input, shape index: {}]
  %s1 = inlined_call_operand.vmem [shape: bf16[4,32,8], index: 1, kind: input, shape index: {}]
  %s2 = inlined_call_operand.vmem [shape: bf16[4,32,8], index: 2, kind: input, shape index: {}]
  %s3 = inlined_call_operand.vmem [shape: bf16[4,32,8], index: 3, kind: input, shape index: {}]
  %s4 = inlined_call_operand.vmem [shape: bf16[4,8,32], index: 4, kind: input, shape index: {}]
  %s5 = inlined_call_operand.vmem [shape: f32[1,32], index: 5, kind: input, shape index: {}]
  %s6 = inlined_call_operand.vmem [shape: f32[1,32], index: 6, kind: input, shape index: {}]
  %s7 = inlined_call_operand.vmem [shape: f32[1,32], index: 7, kind: input, shape index: {}]
  %s8 = inlined_call_operand.vmem [shape: f32[1,32], index: 8, kind: input, shape index: {}]
  %s9 = inlined_call_operand.vmem [shape: f32[1,32], index: 9, kind: input, shape index: {}]
  %s10 = inlined_call_operand.vmem [shape: f32[1,32], index: 10, kind: input, shape index: {}]
  %s11 = inlined_call_operand.vmem [shape: bf16[32,128], index: 11, kind: input, shape index: {}]
  %s12 = inlined_call_operand.vmem [shape: f32[1,128], index: 12, kind: input, shape index: {}]
  %s13 = inlined_call_operand.vmem [shape: f32[1,128], index: 13, kind: input, shape index: {}]
  %s14 = inlined_call_operand.vmem [shape: f32[1,128], index: 14, kind: input, shape index: {}]
  %s15 = inlined_call_operand.vmem [shape: bf16[128,32], index: 15, kind: input, shape index: {}]
  %s16 = inlined_call_operand.vmem [shape: f32[1,32], index: 16, kind: input, shape index: {}]
  %s17 = inlined_call_operand.hbm [shape: f32[2,8,32], index: 17, kind: output, shape index: {}]
  %s18 = sld [smem:[#allocation0]]
  $region101: #{tpu_custom_call.1} parent=0
    _
  %s20 = ssub.s32 1, %s18
  %s21 = scalar_select 0, %s20, %s18
  $region1: #{tpu_custom_call.1} parent=0
    #allocation2 [shape = 'u8[8192]{0}', space=vmem, size = 0x2000, scoped, tag = 'output window, operand 0']
    #allocation3 [shape = 's32[2]{0}', space=sflag, size = 0x8, scoped, tag = 'scoped memory for tpu_custom_call.1']
    %22 = vsyncpa [#allocation3], 0
    %s23 = scalar_lea.sflag [#allocation3], 1
    %24 = vsyncpa %s23, 0
    loop: start=0, step=1, limit=4
    $region2: #{tpu_custom_call.1} parent=1 // loop_pre_header
      _
    $region3: #{tpu_custom_call.1} parent=1 // loop_header
      %s26 = sphi 0, %s30
      %p27 = scmp.ge.s32.totalorder %s26, 4
      %s36 = sphi 0, %s38
      %s39 = sphi 0, %s36
      %s40 = sphi 0, %s39
      %s56 = sphi 0, %s40
      %s60 = sphi 0, %s60
      %s62 = sphi 0, %s60
      %s63 = sphi 0, %s62
      %s77 = sphi 0, %s63
      %s81 = sphi 0, %s81
      %s83 = sphi 0, %s81
      %s84 = sphi 0, %s83
      %s98 = sphi 0, %s84
      %s102 = sphi 0, %s102
      %s104 = sphi 0, %s102
      %s105 = sphi 0, %s104
      %s119 = sphi 0, %s105
      %s123 = sphi 0, %s123
      %s125 = sphi 0, %s123
      %s126 = sphi 0, %s125
      %s140 = sphi 0, %s126
      %s144 = sphi 0, %s144
      %s146 = sphi 0, %s144
      %s147 = sphi 0, %s146
      %s161 = sphi 0, %s147
      %s165 = sphi 0, %s165
      %s167 = sphi 0, %s165
      %s168 = sphi 0, %s167
      %s182 = sphi 0, %s168
      %s186 = sphi 0, %s186
      %s188 = sphi 0, %s186
      %s189 = sphi 0, %s188
      %s203 = sphi 0, %s189
      %s207 = sphi 0, %s207
      %s209 = sphi 0, %s207
      %s210 = sphi 0, %s209
      %s224 = sphi 0, %s210
      %s228 = sphi 0, %s228
      %s230 = sphi 0, %s228
      %s231 = sphi 0, %s230
      %s245 = sphi 0, %s231
      %s249 = sphi 0, %s249
      %s251 = sphi 0, %s249
      %s252 = sphi 0, %s251
      %s266 = sphi 0, %s252
      %s270 = sphi 0, %s270
      %s272 = sphi 0, %s270
      %s273 = sphi 0, %s272
      %s287 = sphi 0, %s273
      %s291 = sphi 0, %s291
      %s293 = sphi 0, %s291
      %s294 = sphi 0, %s293
      %s308 = sphi 0, %s294
      %s312 = sphi 0, %s312
      %s314 = sphi 0, %s312
      %s315 = sphi 0, %s314
      %s329 = sphi 0, %s315
      %s333 = sphi 0, %s333
      %s335 = sphi 0, %s333
      %s336 = sphi 0, %s335
      %s350 = sphi 0, %s336
      %s354 = sphi 0, %s354
      %s356 = sphi 0, %s354
      %s357 = sphi 0, %s356
      %s371 = sphi 0, %s357
      %s375 = sphi 0, %s375
      %s377 = sphi 0, %s375
      %s378 = sphi 0, %s377
      %s392 = sphi 0, %s378
      %s398 = sphi 0, %s400
      %s401 = sphi 0, %s398
      %s402 = sphi 0, %s401
      %s418 = sphi 0, %s402
    $region4: #{tpu_custom_call.1} parent=1 // loop_header_branch
      %29 = sbr.rel (%p27) target = $region8
    $region5: #{tpu_custom_call.1} parent=1 // loop_body
      %s31 = ssub.s32 %s26, 1
      %s32 = ssub.s32 %s26, 2
      %s33 = sadd.s32 %s26, 1
      %s34 = ssub.s32 %s26, %s33
      %p35 = scmp.eq.s32.totalorder %s34, 0
      %s37 = sadd.s32 %s36, 1
      %s38 = scalar_select %p35, %s36, %s37
      %p41 = pneg %p35
      %p42 = scmp.eq.s32.totalorder %s26, 1
      %p43 = por %p41, %p42
      %p44 = scmp.ne.s32.totalorder %s36, %s39
      %p45 = scmp.eq.s32.totalorder %s26, 0
      %p46 = por %p44, %p45
      %p47 = scmp.ne.s32.totalorder %s36, %s39
      %p48 = scmp.eq.s32.totalorder %s31, 1
      %p49 = por %p47, %p48
      %p50 = scmp.ne.s32.totalorder %s39, %s40
      %p51 = scmp.eq.s32.totalorder %s31, 0
      %p52 = por %p50, %p51
      %p53 = scmp.ne.s32.totalorder %s39, %s40
      %p54 = scmp.eq.s32.totalorder %s32, 1
      %p55 = por %p53, %p54
      %p57 = scmp.ne.s32.totalorder %s40, %s56
      %p58 = scmp.eq.s32.totalorder %s32, 0
      %p59 = por %p57, %p58
      %s61 = sadd.s32 %s60, 1
      %p64 = scmp.eq.s32.totalorder %s26, 1
      %p65 = scmp.ne.s32.totalorder %s60, %s62
      %p66 = scmp.eq.s32.totalorder %s26, 0
      %p67 = por %p65, %p66
      %p68 = scmp.ne.s32.totalorder %s60, %s62
      %p69 = scmp.eq.s32.totalorder %s31, 1
      %p70 = por %p68, %p69
      %p71 = scmp.ne.s32.totalorder %s62, %s63
      %p72 = scmp.eq.s32.totalorder %s31, 0
      %p73 = por %p71, %p72
      %p74 = scmp.ne.s32.totalorder %s62, %s63
      %p75 = scmp.eq.s32.totalorder %s32, 1
      %p76 = por %p74, %p75
      %p78 = scmp.ne.s32.totalorder %s63, %s77
      %p79 = scmp.eq.s32.totalorder %s32, 0
      %p80 = por %p78, %p79
      %s82 = sadd.s32 %s81, 1
      %p85 = scmp.eq.s32.totalorder %s26, 1
      %p86 = scmp.ne.s32.totalorder %s81, %s83
      %p87 = scmp.eq.s32.totalorder %s26, 0
      %p88 = por %p86, %p87
      %p89 = scmp.ne.s32.totalorder %s81, %s83
      %p90 = scmp.eq.s32.totalorder %s31, 1
      %p91 = por %p89, %p90
      %p92 = scmp.ne.s32.totalorder %s83, %s84
      %p93 = scmp.eq.s32.totalorder %s31, 0
      %p94 = por %p92, %p93
      %p95 = scmp.ne.s32.totalorder %s83, %s84
      %p96 = scmp.eq.s32.totalorder %s32, 1
      %p97 = por %p95, %p96
      %p99 = scmp.ne.s32.totalorder %s84, %s98
      %p100 = scmp.eq.s32.totalorder %s32, 0
      %p101 = por %p99, %p100
      %s103 = sadd.s32 %s102, 1
      %p106 = scmp.eq.s32.totalorder %s26, 1
      %p107 = scmp.ne.s32.totalorder %s102, %s104
      %p108 = scmp.eq.s32.totalorder %s26, 0
      %p109 = por %p107, %p108
      %p110 = scmp.ne.s32.totalorder %s102, %s104
      %p111 = scmp.eq.s32.totalorder %s31, 1
      %p112 = por %p110, %p111
      %p113 = scmp.ne.s32.totalorder %s104, %s105
      %p114 = scmp.eq.s32.totalorder %s31, 0
      %p115 = por %p113, %p114
      %p116 = scmp.ne.s32.totalorder %s104, %s105
      %p117 = scmp.eq.s32.totalorder %s32, 1
      %p118 = por %p116, %p117
      %p120 = scmp.ne.s32.totalorder %s105, %s119
      %p121 = scmp.eq.s32.totalorder %s32, 0
      %p122 = por %p120, %p121
      %s124 = sadd.s32 %s123, 1
      %p127 = scmp.eq.s32.totalorder %s26, 1
      %p128 = scmp.ne.s32.totalorder %s123, %s125
      %p129 = scmp.eq.s32.totalorder %s26, 0
      %p130 = por %p128, %p129
      %p131 = scmp.ne.s32.totalorder %s123, %s125
      %p132 = scmp.eq.s32.totalorder %s31, 1
      %p133 = por %p131, %p132
      %p134 = scmp.ne.s32.totalorder %s125, %s126
      %p135 = scmp.eq.s32.totalorder %s31, 0
      %p136 = por %p134, %p135
      %p137 = scmp.ne.s32.totalorder %s125, %s126
      %p138 = scmp.eq.s32.totalorder %s32, 1
      %p139 = por %p137, %p138
      %p141 = scmp.ne.s32.totalorder %s126, %s140
      %p142 = scmp.eq.s32.totalorder %s32, 0
      %p143 = por %p141, %p142
      %s145 = sadd.s32 %s144, 1
      %p148 = scmp.eq.s32.totalorder %s26, 1
      %p149 = scmp.ne.s32.totalorder %s144, %s146
      %p150 = scmp.eq.s32.totalorder %s26, 0
      %p151 = por %p149, %p150
      %p152 = scmp.ne.s32.totalorder %s144, %s146
      %p153 = scmp.eq.s32.totalorder %s31, 1
      %p154 = por %p152, %p153
      %p155 = scmp.ne.s32.totalorder %s146, %s147
      %p156 = scmp.eq.s32.totalorder %s31, 0
      %p157 = por %p155, %p156
      %p158 = scmp.ne.s32.totalorder %s146, %s147
      %p159 = scmp.eq.s32.totalorder %s32, 1
      %p160 = por %p158, %p159
      %p162 = scmp.ne.s32.totalorder %s147, %s161
      %p163 = scmp.eq.s32.totalorder %s32, 0
      %p164 = por %p162, %p163
      %s166 = sadd.s32 %s165, 1
      %p169 = scmp.eq.s32.totalorder %s26, 1
      %p170 = scmp.ne.s32.totalorder %s165, %s167
      %p171 = scmp.eq.s32.totalorder %s26, 0
      %p172 = por %p170, %p171
      %p173 = scmp.ne.s32.totalorder %s165, %s167
      %p174 = scmp.eq.s32.totalorder %s31, 1
      %p175 = por %p173, %p174
      %p176 = scmp.ne.s32.totalorder %s167, %s168
      %p177 = scmp.eq.s32.totalorder %s31, 0
      %p178 = por %p176, %p177
      %p179 = scmp.ne.s32.totalorder %s167, %s168
      %p180 = scmp.eq.s32.totalorder %s32, 1
      %p181 = por %p179, %p180
      %p183 = scmp.ne.s32.totalorder %s168, %s182
      %p184 = scmp.eq.s32.totalorder %s32, 0
      %p185 = por %p183, %p184
      %s187 = sadd.s32 %s186, 1
      %p190 = scmp.eq.s32.totalorder %s26, 1
      %p191 = scmp.ne.s32.totalorder %s186, %s188
      %p192 = scmp.eq.s32.totalorder %s26, 0
      %p193 = por %p191, %p192
      %p194 = scmp.ne.s32.totalorder %s186, %s188
      %p195 = scmp.eq.s32.totalorder %s31, 1
      %p196 = por %p194, %p195
      %p197 = scmp.ne.s32.totalorder %s188, %s189
      %p198 = scmp.eq.s32.totalorder %s31, 0
      %p199 = por %p197, %p198
      %p200 = scmp.ne.s32.totalorder %s188, %s189
      %p201 = scmp.eq.s32.totalorder %s32, 1
      %p202 = por %p200, %p201
      %p204 = scmp.ne.s32.totalorder %s189, %s203
      %p205 = scmp.eq.s32.totalorder %s32, 0
      %p206 = por %p204, %p205
      %s208 = sadd.s32 %s207, 1
      %p211 = scmp.eq.s32.totalorder %s26, 1
      %p212 = scmp.ne.s32.totalorder %s207, %s209
      %p213 = scmp.eq.s32.totalorder %s26, 0
      %p214 = por %p212, %p213
      %p215 = scmp.ne.s32.totalorder %s207, %s209
      %p216 = scmp.eq.s32.totalorder %s31, 1
      %p217 = por %p215, %p216
      %p218 = scmp.ne.s32.totalorder %s209, %s210
      %p219 = scmp.eq.s32.totalorder %s31, 0
      %p220 = por %p218, %p219
      %p221 = scmp.ne.s32.totalorder %s209, %s210
      %p222 = scmp.eq.s32.totalorder %s32, 1
      %p223 = por %p221, %p222
      %p225 = scmp.ne.s32.totalorder %s210, %s224
      %p226 = scmp.eq.s32.totalorder %s32, 0
      %p227 = por %p225, %p226
      %s229 = sadd.s32 %s228, 1
      %p232 = scmp.eq.s32.totalorder %s26, 1
      %p233 = scmp.ne.s32.totalorder %s228, %s230
      %p234 = scmp.eq.s32.totalorder %s26, 0
      %p235 = por %p233, %p234
      %p236 = scmp.ne.s32.totalorder %s228, %s230
      %p237 = scmp.eq.s32.totalorder %s31, 1
      %p238 = por %p236, %p237
      %p239 = scmp.ne.s32.totalorder %s230, %s231
      %p240 = scmp.eq.s32.totalorder %s31, 0
      %p241 = por %p239, %p240
      %p242 = scmp.ne.s32.totalorder %s230, %s231
      %p243 = scmp.eq.s32.totalorder %s32, 1
      %p244 = por %p242, %p243
      %p246 = scmp.ne.s32.totalorder %s231, %s245
      %p247 = scmp.eq.s32.totalorder %s32, 0
      %p248 = por %p246, %p247
      %s250 = sadd.s32 %s249, 1
      %p253 = scmp.eq.s32.totalorder %s26, 1
      %p254 = scmp.ne.s32.totalorder %s249, %s251
      %p255 = scmp.eq.s32.totalorder %s26, 0
      %p256 = por %p254, %p255
      %p257 = scmp.ne.s32.totalorder %s249, %s251
      %p258 = scmp.eq.s32.totalorder %s31, 1
      %p259 = por %p257, %p258
      %p260 = scmp.ne.s32.totalorder %s251, %s252
      %p261 = scmp.eq.s32.totalorder %s31, 0
      %p262 = por %p260, %p261
      %p263 = scmp.ne.s32.totalorder %s251, %s252
      %p264 = scmp.eq.s32.totalorder %s32, 1
      %p265 = por %p263, %p264
      %p267 = scmp.ne.s32.totalorder %s252, %s266
      %p268 = scmp.eq.s32.totalorder %s32, 0
      %p269 = por %p267, %p268
      %s271 = sadd.s32 %s270, 1
      %p274 = scmp.eq.s32.totalorder %s26, 1
      %p275 = scmp.ne.s32.totalorder %s270, %s272
      %p276 = scmp.eq.s32.totalorder %s26, 0
      %p277 = por %p275, %p276
      %p278 = scmp.ne.s32.totalorder %s270, %s272
      %p279 = scmp.eq.s32.totalorder %s31, 1
      %p280 = por %p278, %p279
      %p281 = scmp.ne.s32.totalorder %s272, %s273
      %p282 = scmp.eq.s32.totalorder %s31, 0
      %p283 = por %p281, %p282
      %p284 = scmp.ne.s32.totalorder %s272, %s273
      %p285 = scmp.eq.s32.totalorder %s32, 1
      %p286 = por %p284, %p285
      %p288 = scmp.ne.s32.totalorder %s273, %s287
      %p289 = scmp.eq.s32.totalorder %s32, 0
      %p290 = por %p288, %p289
      %s292 = sadd.s32 %s291, 1
      %p295 = scmp.eq.s32.totalorder %s26, 1
      %p296 = scmp.ne.s32.totalorder %s291, %s293
      %p297 = scmp.eq.s32.totalorder %s26, 0
      %p298 = por %p296, %p297
      %p299 = scmp.ne.s32.totalorder %s291, %s293
      %p300 = scmp.eq.s32.totalorder %s31, 1
      %p301 = por %p299, %p300
      %p302 = scmp.ne.s32.totalorder %s293, %s294
      %p303 = scmp.eq.s32.totalorder %s31, 0
      %p304 = por %p302, %p303
      %p305 = scmp.ne.s32.totalorder %s293, %s294
      %p306 = scmp.eq.s32.totalorder %s32, 1
      %p307 = por %p305, %p306
      %p309 = scmp.ne.s32.totalorder %s294, %s308
      %p310 = scmp.eq.s32.totalorder %s32, 0
      %p311 = por %p309, %p310
      %s313 = sadd.s32 %s312, 1
      %p316 = scmp.eq.s32.totalorder %s26, 1
      %p317 = scmp.ne.s32.totalorder %s312, %s314
      %p318 = scmp.eq.s32.totalorder %s26, 0
      %p319 = por %p317, %p318
      %p320 = scmp.ne.s32.totalorder %s312, %s314
      %p321 = scmp.eq.s32.totalorder %s31, 1
      %p322 = por %p320, %p321
      %p323 = scmp.ne.s32.totalorder %s314, %s315
      %p324 = scmp.eq.s32.totalorder %s31, 0
      %p325 = por %p323, %p324
      %p326 = scmp.ne.s32.totalorder %s314, %s315
      %p327 = scmp.eq.s32.totalorder %s32, 1
      %p328 = por %p326, %p327
      %p330 = scmp.ne.s32.totalorder %s315, %s329
      %p331 = scmp.eq.s32.totalorder %s32, 0
      %p332 = por %p330, %p331
      %s334 = sadd.s32 %s333, 1
      %p337 = scmp.eq.s32.totalorder %s26, 1
      %p338 = scmp.ne.s32.totalorder %s333, %s335
      %p339 = scmp.eq.s32.totalorder %s26, 0
      %p340 = por %p338, %p339
      %p341 = scmp.ne.s32.totalorder %s333, %s335
      %p342 = scmp.eq.s32.totalorder %s31, 1
      %p343 = por %p341, %p342
      %p344 = scmp.ne.s32.totalorder %s335, %s336
      %p345 = scmp.eq.s32.totalorder %s31, 0
      %p346 = por %p344, %p345
      %p347 = scmp.ne.s32.totalorder %s335, %s336
      %p348 = scmp.eq.s32.totalorder %s32, 1
      %p349 = por %p347, %p348
      %p351 = scmp.ne.s32.totalorder %s336, %s350
      %p352 = scmp.eq.s32.totalorder %s32, 0
      %p353 = por %p351, %p352
      %s355 = sadd.s32 %s354, 1
      %p358 = scmp.eq.s32.totalorder %s26, 1
      %p359 = scmp.ne.s32.totalorder %s354, %s356
      %p360 = scmp.eq.s32.totalorder %s26, 0
      %p361 = por %p359, %p360
      %p362 = scmp.ne.s32.totalorder %s354, %s356
      %p363 = scmp.eq.s32.totalorder %s31, 1
      %p364 = por %p362, %p363
      %p365 = scmp.ne.s32.totalorder %s356, %s357
      %p366 = scmp.eq.s32.totalorder %s31, 0
      %p367 = por %p365, %p366
      %p368 = scmp.ne.s32.totalorder %s356, %s357
      %p369 = scmp.eq.s32.totalorder %s32, 1
      %p370 = por %p368, %p369
      %p372 = scmp.ne.s32.totalorder %s357, %s371
      %p373 = scmp.eq.s32.totalorder %s32, 0
      %p374 = por %p372, %p373
      %s376 = sadd.s32 %s375, 1
      %p379 = scmp.eq.s32.totalorder %s26, 1
      %p380 = scmp.ne.s32.totalorder %s375, %s377
      %p381 = scmp.eq.s32.totalorder %s26, 0
      %p382 = por %p380, %p381
      %p383 = scmp.ne.s32.totalorder %s375, %s377
      %p384 = scmp.eq.s32.totalorder %s31, 1
      %p385 = por %p383, %p384
      %p386 = scmp.ne.s32.totalorder %s377, %s378
      %p387 = scmp.eq.s32.totalorder %s31, 0
      %p388 = por %p386, %p387
      %p389 = scmp.ne.s32.totalorder %s377, %s378
      %p390 = scmp.eq.s32.totalorder %s32, 1
      %p391 = por %p389, %p390
      %p393 = scmp.ne.s32.totalorder %s378, %s392
      %p394 = scmp.eq.s32.totalorder %s32, 0
      %p395 = por %p393, %p394
      %s396 = ssub.s32 %s26, %s33
      %p397 = scmp.eq.s32.totalorder %s396, 0
      %s399 = sadd.s32 %s398, 1
      %s400 = scalar_select %p397, %s398, %s399
      %p403 = pneg %p397
      %p404 = scmp.eq.s32.totalorder %s26, 1
      %p405 = por %p403, %p404
      %p406 = scmp.ne.s32.totalorder %s398, %s401
      %p407 = scmp.eq.s32.totalorder %s26, 0
      %p408 = por %p406, %p407
      %p409 = scmp.ne.s32.totalorder %s398, %s401
      %p410 = scmp.eq.s32.totalorder %s31, 1
      %p411 = por %p409, %p410
      %p412 = scmp.ne.s32.totalorder %s401, %s402
      %p413 = scmp.eq.s32.totalorder %s31, 0
      %p414 = por %p412, %p413
      %p415 = scmp.ne.s32.totalorder %s401, %s402
      %p416 = scmp.eq.s32.totalorder %s32, 1
      %p417 = por %p415, %p416
      %p419 = scmp.ne.s32.totalorder %s402, %s418
      %p420 = scmp.eq.s32.totalorder %s32, 0
      %p421 = por %p419, %p420
      %p422 = scmp.le.s32.totalorder 1, %s26
      %p423 = scmp.lt.s32.totalorder %s26, 3
      %p424 = pnand %p422, %p423
      %p425 = pneg %p424
      // Predicated region
      $region9: #{tpu_custom_call.1} parent=5 // pred_check
        _
      $region10: #{tpu_custom_call.1} parent=5 // pred_check_branch
        %427 = sbr.rel (%p424) target = $region12
      $region11: #{tpu_custom_call.1} parent=5 // pred_region
        %s428 = ssub.s32 %s26, 1
        // Predicated region
        $region13: #{tpu_custom_call.1} parent=11 // pred_check
          %p429 = pneg %p73
        $region14: #{tpu_custom_call.1} parent=11 // pred_check_branch
          %431 = sbr.rel (%p429) target = $region16
        $region15: #{tpu_custom_call.1} parent=11 // pred_region
          _
        $region16: #{tpu_custom_call.1} parent=11 // pred_fallthru
          _
        // Predicated region
        $region17: #{tpu_custom_call.1} parent=11 // pred_check
          %p432 = pneg %p94
        $region18: #{tpu_custom_call.1} parent=11 // pred_check_branch
          %434 = sbr.rel (%p432) target = $region20
        $region19: #{tpu_custom_call.1} parent=11 // pred_region
          _
        $region20: #{tpu_custom_call.1} parent=11 // pred_fallthru
          _
        // Predicated region
        $region21: #{tpu_custom_call.1} parent=11 // pred_check
          %p435 = pneg %p115
        $region22: #{tpu_custom_call.1} parent=11 // pred_check_branch
          %437 = sbr.rel (%p435) target = $region24
        $region23: #{tpu_custom_call.1} parent=11 // pred_region
          _
        $region24: #{tpu_custom_call.1} parent=11 // pred_fallthru
          _
        // Predicated region
        $region25: #{tpu_custom_call.1} parent=11 // pred_check
          %p438 = pneg %p136
        $region26: #{tpu_custom_call.1} parent=11 // pred_check_branch
          %440 = sbr.rel (%p438) target = $region28
        $region27: #{tpu_custom_call.1} parent=11 // pred_region
          _
        $region28: #{tpu_custom_call.1} parent=11 // pred_fallthru
          _
        // Predicated region
        $region29: #{tpu_custom_call.1} parent=11 // pred_check
          %p441 = pneg %p157
        $region30: #{tpu_custom_call.1} parent=11 // pred_check_branch
          %443 = sbr.rel (%p441) target = $region32
        $region31: #{tpu_custom_call.1} parent=11 // pred_region
          _
        $region32: #{tpu_custom_call.1} parent=11 // pred_fallthru
          _
        // Predicated region
        $region33: #{tpu_custom_call.1} parent=11 // pred_check
          %p444 = pneg %p178
        $region34: #{tpu_custom_call.1} parent=11 // pred_check_branch
          %446 = sbr.rel (%p444) target = $region36
        $region35: #{tpu_custom_call.1} parent=11 // pred_region
          _
        $region36: #{tpu_custom_call.1} parent=11 // pred_fallthru
          _
        // Predicated region
        $region37: #{tpu_custom_call.1} parent=11 // pred_check
          %p447 = pneg %p199
        $region38: #{tpu_custom_call.1} parent=11 // pred_check_branch
          %449 = sbr.rel (%p447) target = $region40
        $region39: #{tpu_custom_call.1} parent=11 // pred_region
          _
        $region40: #{tpu_custom_call.1} parent=11 // pred_fallthru
          _
        // Predicated region
        $region41: #{tpu_custom_call.1} parent=11 // pred_check
          %p450 = pneg %p220
        $region42: #{tpu_custom_call.1} parent=11 // pred_check_branch
          %452 = sbr.rel (%p450) target = $region44
        $region43: #{tpu_custom_call.1} parent=11 // pred_region
          _
        $region44: #{tpu_custom_call.1} parent=11 // pred_fallthru
          _
        // Predicated region
        $region45: #{tpu_custom_call.1} parent=11 // pred_check
          %p453 = pneg %p241
        $region46: #{tpu_custom_call.1} parent=11 // pred_check_branch
          %455 = sbr.rel (%p453) target = $region48
        $region47: #{tpu_custom_call.1} parent=11 // pred_region
          _
        $region48: #{tpu_custom_call.1} parent=11 // pred_fallthru
          _
        // Predicated region
        $region49: #{tpu_custom_call.1} parent=11 // pred_check
          %p456 = pneg %p262
        $region50: #{tpu_custom_call.1} parent=11 // pred_check_branch
          %458 = sbr.rel (%p456) target = $region52
        $region51: #{tpu_custom_call.1} parent=11 // pred_region
          _
        $region52: #{tpu_custom_call.1} parent=11 // pred_fallthru
          _
        // Predicated region
        $region53: #{tpu_custom_call.1} parent=11 // pred_check
          %p459 = pneg %p283
        $region54: #{tpu_custom_call.1} parent=11 // pred_check_branch
          %461 = sbr.rel (%p459) target = $region56
        $region55: #{tpu_custom_call.1} parent=11 // pred_region
          _
        $region56: #{tpu_custom_call.1} parent=11 // pred_fallthru
          _
        // Predicated region
        $region57: #{tpu_custom_call.1} parent=11 // pred_check
          %p462 = pneg %p304
        $region58: #{tpu_custom_call.1} parent=11 // pred_check_branch
          %464 = sbr.rel (%p462) target = $region60
        $region59: #{tpu_custom_call.1} parent=11 // pred_region
          _
        $region60: #{tpu_custom_call.1} parent=11 // pred_fallthru
          _
        // Predicated region
        $region61: #{tpu_custom_call.1} parent=11 // pred_check
          %p465 = pneg %p325
        $region62: #{tpu_custom_call.1} parent=11 // pred_check_branch
          %467 = sbr.rel (%p465) target = $region64
        $region63: #{tpu_custom_call.1} parent=11 // pred_region
          _
        $region64: #{tpu_custom_call.1} parent=11 // pred_fallthru
          _
        // Predicated region
        $region65: #{tpu_custom_call.1} parent=11 // pred_check
          %p468 = pneg %p346
        $region66: #{tpu_custom_call.1} parent=11 // pred_check_branch
          %470 = sbr.rel (%p468) target = $region68
        $region67: #{tpu_custom_call.1} parent=11 // pred_region
          _
        $region68: #{tpu_custom_call.1} parent=11 // pred_fallthru
          _
        // Predicated region
        $region69: #{tpu_custom_call.1} parent=11 // pred_check
          %p471 = pneg %p367
        $region70: #{tpu_custom_call.1} parent=11 // pred_check_branch
          %473 = sbr.rel (%p471) target = $region72
        $region71: #{tpu_custom_call.1} parent=11 // pred_region
          _
        $region72: #{tpu_custom_call.1} parent=11 // pred_fallthru
          _
        // Predicated region
        $region73: #{tpu_custom_call.1} parent=11 // pred_check
          %p474 = pneg %p388
        $region74: #{tpu_custom_call.1} parent=11 // pred_check_branch
          %476 = sbr.rel (%p474) target = $region76
        $region75: #{tpu_custom_call.1} parent=11 // pred_region
          _
        $region76: #{tpu_custom_call.1} parent=11 // pred_fallthru
          _
      $region12: #{tpu_custom_call.1} parent=5 // pred_fallthru
        _
      %p477 = scmp.lt.s32.totalorder %s26, 2
      // Predicated region
      $region77: #{tpu_custom_call.1} parent=5 // pred_check
        %p478 = pneg %p477
      $region78: #{tpu_custom_call.1} parent=5 // pred_check_branch
        %480 = sbr.rel (%p478) target = $region80
      $region79: #{tpu_custom_call.1} parent=5 // pred_region
        // Predicated region
        $region81: #{tpu_custom_call.1} parent=79 // pred_check
          %p481 = pneg %p46
        $region82: #{tpu_custom_call.1} parent=79 // pred_check_branch
          %483 = sbr.rel (%p481) target = $region84
        $region83: #{tpu_custom_call.1} parent=79 // pred_region
          %p484 = scmp.lt.s32.totalorder %s26, 1
          %s485 = scalar_select %p484, %s26, 1
          %s486 = smul.addr %s485, 8
          %s487 = scalar_lea.vmem %s0, %s486
        $region84: #{tpu_custom_call.1} parent=79 // pred_fallthru
          _
      $region80: #{tpu_custom_call.1} parent=5 // pred_fallthru
        _
      %p488 = scmp.le.s32.totalorder 1, %s26
      %p489 = scmp.lt.s32.totalorder %s26, 3
      %p490 = pnand %p488, %p489
      %p491 = pneg %p490
      // Predicated region
      $region85: #{tpu_custom_call.1} parent=5 // pred_check
        _
      $region86: #{tpu_custom_call.1} parent=5 // pred_check_branch
        %493 = sbr.rel (%p490) target = $region88
      $region87: #{tpu_custom_call.1} parent=5 // pred_region
        %s494 = ssub.s32 %s26, 1
        %p495 = scmp.lt.s32.totalorder %s31, 1
        %s496 = scalar_select %p495, %s31, 1
        %s497 = smul.addr %s496, 8
        %s498 = scalar_lea.vmem %s0, %s497
        %p499 = pneg %p52
        %p500 = pneg %p49
        %p501 = pneg %p73
        %p502 = pneg %p70
        %p503 = pneg %p94
        %p504 = pneg %p91
        %p505 = pneg %p115
        %p506 = pneg %p112
        %p507 = pneg %p136
        %p508 = pneg %p133
        %p509 = pneg %p157
        %p510 = pneg %p154
        %p511 = pneg %p178
        %p512 = pneg %p175
        %p513 = pneg %p199
        %p514 = pneg %p196
        %p515 = pneg %p220
        %p516 = pneg %p217
        %p517 = pneg %p241
        %p518 = pneg %p238
        %p519 = pneg %p262
        %p520 = pneg %p259
        %p521 = pneg %p283
        %p522 = pneg %p280
        %p523 = pneg %p304
        %p524 = pneg %p301
        %p525 = pneg %p325
        %p526 = pneg %p322
        %p527 = pneg %p346
        %p528 = pneg %p343
        %p529 = pneg %p367
        %p530 = pneg %p364
        %p531 = pneg %p388
        %p532 = pneg %p385
        %p533 = pneg %p414
        %p534 = pneg %p411
        %s535 = sand.u32 %s401, 1
        %s536 = scalar_lea.sflag [#allocation3], %s535
        %s537 = sand.u32 %s401, 1
        %s538 = smul.addr %s537, 8
        %s539 = scalar_lea.vmem [#allocation2], %s538
        %p540 = scmp.lt.s32.totalorder %s31, 1
        %s541 = scalar_select %p540, %s31, 1
        %s542 = smul.addr %s541, 8
        %s543 = scalar_lea.vmem %s0, %s542
        %v545 = vld [vmem:[%s543] sm:$0xff]
        %v546 = vpack.c.bf16 %v545, %v545
        %v547 = vld [vmem:[%s1] sm:$0xf]
        %v548 = vld [vmem:[%s1 + $0x4] sm:$0xf]
        %v549 = vld [vmem:[%s1 + $0x8] sm:$0xf]
        %v550 = vld [vmem:[%s1 + $0xc] sm:$0xf]
        %v551 = vld [vmem:[%s1 + $0x10] sm:$0xf]
        %v552 = vld [vmem:[%s1 + $0x14] sm:$0xf]
        %v553 = vld [vmem:[%s1 + $0x18] sm:$0xf]
        %v554 = vld [vmem:[%s1 + $0x1c] sm:$0xf]
        %v555 = vld [vmem:[%s1 + $0x20] sm:$0xf]
        %v556 = vld [vmem:[%s1 + $0x24] sm:$0xf]
        %v557 = vld [vmem:[%s1 + $0x28] sm:$0xf]
        %v558 = vld [vmem:[%s1 + $0x2c] sm:$0xf]
        %v559 = vld [vmem:[%s1 + $0x30] sm:$0xf]
        %v560 = vld [vmem:[%s1 + $0x34] sm:$0xf]
        %v561 = vld [vmem:[%s1 + $0x38] sm:$0xf]
        %v562 = vld [vmem:[%s1 + $0x3c] sm:$0xf]
        %v567 = vunpack.c.l.b16 %v547
        %v568 = vunpack.c.l.b16 %v548
        %v569 = vunpack.c.l.b16 %v549
        %v570 = vunpack.c.l.b16 %v550
        %v571 = vpack.c.b16 %v568, %v567
        %v572 = vpack.c.b16 %v570, %v569
        %vm575 = vcmask 261120
        %v577 = vsel %vm575, %v546, 0
        %579 = vmatprep.subr.bf16.mxu0 0
        %580 = vmatpush1.bf16.msra.mxu0 0
        %581 = vmatprep.subr.bf16.mxu0 0
        %582 = vmatpush1.bf16.msra.mxu0 0
        %583 = vmatprep.subr.bf16.mxu0 0
        %584 = vmatpush1.bf16.msra.mxu0 0
        %585 = vmatprep.subr.bf16.mxu0 0
        %586 = vmatpush1.bf16.msra.mxu0 0
        %587 = vmatprep.subr.bf16.mxu0 0
        %588 = vmatpush1.bf16.msra.mxu0 0
        %589 = vmatprep.subr.bf16.mxu0 0
        %590 = vmatpush1.bf16.msra.mxu0 0
        %591 = vmatprep.subr.bf16.mxu0 0
        %592 = vmatpush1.bf16.msra.mxu0 %v572
        %593 = vmatprep.subr.bf16.mxu0 0
        %594 = vmatpush1.bf16.msra.mxu0 %v571
        %595 = vmatprep.subr.bf16.mxu0 0
        %596 = vmatpush2.bf16.msra.mxu0 0
        %597 = vmatprep.subr.bf16.mxu0 0
        %598 = vmatpush2.bf16.msra.mxu0 0
        %599 = vmatprep.subr.bf16.mxu0 0
        %600 = vmatpush2.bf16.msra.mxu0 0
        %601 = vmatprep.subr.bf16.mxu0 0
        %602 = vmatpush2.bf16.msra.mxu0 0
        %603 = vmatprep.subr.bf16.mxu0 0
        %604 = vmatpush2.bf16.msra.mxu0 0
        %605 = vmatprep.subr.bf16.mxu0 0
        %606 = vmatpush2.bf16.msra.mxu0 0
        %607 = vmatprep.subr.bf16.mxu0 0
        %608 = vmatpush2.bf16.msra.mxu0 0
        %609 = vmatprep.subr.bf16.mxu0 0
        %610 = vmatpush2.bf16.msra.mxu0 0
        %611 = vmatprep.mubr.bf16.mxu0 0
        %612 = vmatmul.mubr.bf16.gmra.mxu0 %v577
        %v613 = vpop.f32.mrf.mxu0
        %v614 = vadd.f32 0.0, %v613
        %v615 = vpop.f32.mrf.mxu0
        %v616 = vpop.f32.mrf.mxu0
        %v617 = vpop.f32.mrf.mxu0
        %618 = vdwg.mxu0
        %v623 = vunpack.c.l.b16 %v551
        %v624 = vunpack.c.l.b16 %v552
        %v625 = vunpack.c.l.b16 %v553
        %v626 = vunpack.c.l.b16 %v554
        %v627 = vpack.c.b16 %v624, %v623
        %v628 = vpack.c.b16 %v626, %v625
        %631 = vmatprep.subr.bf16.mxu0 0
        %632 = vmatpush1.bf16.msra.mxu0 0
        %633 = vmatprep.subr.bf16.mxu0 0
        %634 = vmatpush1.bf16.msra.mxu0 0
        %635 = vmatprep.subr.bf16.mxu0 0
        %636 = vmatpush1.bf16.msra.mxu0 0
        %637 = vmatprep.subr.bf16.mxu0 0
        %638 = vmatpush1.bf16.msra.mxu0 0
        %639 = vmatprep.subr.bf16.mxu0 0
        %640 = vmatpush1.bf16.msra.mxu0 0
        %641 = vmatprep.subr.bf16.mxu0 0
        %642 = vmatpush1.bf16.msra.mxu0 0
        %643 = vmatprep.subr.bf16.mxu0 0
        %644 = vmatpush1.bf16.msra.mxu0 %v628
        %645 = vmatprep.subr.bf16.mxu0 0
        %646 = vmatpush1.bf16.msra.mxu0 %v627
        %647 = vmatprep.subr.bf16.mxu0 0
        %648 = vmatpush2.bf16.msra.mxu0 0
        %649 = vmatprep.subr.bf16.mxu0 0
        %650 = vmatpush2.bf16.msra.mxu0 0
        %651 = vmatprep.subr.bf16.mxu0 0
        %652 = vmatpush2.bf16.msra.mxu0 0
        %653 = vmatprep.subr.bf16.mxu0 0
        %654 = vmatpush2.bf16.msra.mxu0 0
        %655 = vmatprep.subr.bf16.mxu0 0
        %656 = vmatpush2.bf16.msra.mxu0 0
        %657 = vmatprep.subr.bf16.mxu0 0
        %658 = vmatpush2.bf16.msra.mxu0 0
        %659 = vmatprep.subr.bf16.mxu0 0
        %660 = vmatpush2.bf16.msra.mxu0 0
        %661 = vmatprep.subr.bf16.mxu0 0
        %662 = vmatpush2.bf16.msra.mxu0 0
        %663 = vmatprep.mubr.bf16.mxu0 0
        %664 = vmatmul.mubr.bf16.gmra.mxu0 %v577
        %v665 = vpop.f32.mrf.mxu0
        %v666 = vadd.f32 0.0, %v665
        %v667 = vpop.f32.mrf.mxu0
        %v668 = vpop.f32.mrf.mxu0
        %v669 = vpop.f32.mrf.mxu0
        %670 = vdwg.mxu0
        %v675 = vunpack.c.l.b16 %v555
        %v676 = vunpack.c.l.b16 %v556
        %v677 = vunpack.c.l.b16 %v557
        %v678 = vunpack.c.l.b16 %v558
        %v679 = vpack.c.b16 %v676, %v675
        %v680 = vpack.c.b16 %v678, %v677
        %683 = vmatprep.subr.bf16.mxu0 0
        %684 = vmatpush1.bf16.msra.mxu0 0
        %685 = vmatprep.subr.bf16.mxu0 0
        %686 = vmatpush1.bf16.msra.mxu0 0
        %687 = vmatprep.subr.bf16.mxu0 0
        %688 = vmatpush1.bf16.msra.mxu0 0
        %689 = vmatprep.subr.bf16.mxu0 0
        %690 = vmatpush1.bf16.msra.mxu0 0
        %691 = vmatprep.subr.bf16.mxu0 0
        %692 = vmatpush1.bf16.msra.mxu0 0
        %693 = vmatprep.subr.bf16.mxu0 0
        %694 = vmatpush1.bf16.msra.mxu0 0
        %695 = vmatprep.subr.bf16.mxu0 0
        %696 = vmatpush1.bf16.msra.mxu0 %v680
        %697 = vmatprep.subr.bf16.mxu0 0
        %698 = vmatpush1.bf16.msra.mxu0 %v679
        %699 = vmatprep.subr.bf16.mxu0 0
        %700 = vmatpush2.bf16.msra.mxu0 0
        %701 = vmatprep.subr.bf16.mxu0 0
        %702 = vmatpush2.bf16.msra.mxu0 0
        %703 = vmatprep.subr.bf16.mxu0 0
        %704 = vmatpush2.bf16.msra.mxu0 0
        %705 = vmatprep.subr.bf16.mxu0 0
        %706 = vmatpush2.bf16.msra.mxu0 0
        %707 = vmatprep.subr.bf16.mxu0 0
        %708 = vmatpush2.bf16.msra.mxu0 0
        %709 = vmatprep.subr.bf16.mxu0 0
        %710 = vmatpush2.bf16.msra.mxu0 0
        %711 = vmatprep.subr.bf16.mxu0 0
        %712 = vmatpush2.bf16.msra.mxu0 0
        %713 = vmatprep.subr.bf16.mxu0 0
        %714 = vmatpush2.bf16.msra.mxu0 0
        %715 = vmatprep.mubr.bf16.mxu0 0
        %716 = vmatmul.mubr.bf16.gmra.mxu0 %v577
        %v717 = vpop.f32.mrf.mxu0
        %v718 = vadd.f32 0.0, %v717
        %v719 = vpop.f32.mrf.mxu0
        %v720 = vpop.f32.mrf.mxu0
        %v721 = vpop.f32.mrf.mxu0
        %722 = vdwg.mxu0
        %v727 = vunpack.c.l.b16 %v559
        %v728 = vunpack.c.l.b16 %v560
        %v729 = vunpack.c.l.b16 %v561
        %v730 = vunpack.c.l.b16 %v562
        %v731 = vpack.c.b16 %v728, %v727
        %v732 = vpack.c.b16 %v730, %v729
        %735 = vmatprep.subr.bf16.mxu0 0
        %736 = vmatpush1.bf16.msra.mxu0 0
        %737 = vmatprep.subr.bf16.mxu0 0
        %738 = vmatpush1.bf16.msra.mxu0 0
        %739 = vmatprep.subr.bf16.mxu0 0
        %740 = vmatpush1.bf16.msra.mxu0 0
        %741 = vmatprep.subr.bf16.mxu0 0
        %742 = vmatpush1.bf16.msra.mxu0 0
        %743 = vmatprep.subr.bf16.mxu0 0
        %744 = vmatpush1.bf16.msra.mxu0 0
        %745 = vmatprep.subr.bf16.mxu0 0
        %746 = vmatpush1.bf16.msra.mxu0 0
        %747 = vmatprep.subr.bf16.mxu0 0
        %748 = vmatpush1.bf16.msra.mxu0 %v732
        %749 = vmatprep.subr.bf16.mxu0 0
        %750 = vmatpush1.bf16.msra.mxu0 %v731
        %751 = vmatprep.subr.bf16.mxu0 0
        %752 = vmatpush2.bf16.msra.mxu0 0
        %753 = vmatprep.subr.bf16.mxu0 0
        %754 = vmatpush2.bf16.msra.mxu0 0
        %755 = vmatprep.subr.bf16.mxu0 0
        %756 = vmatpush2.bf16.msra.mxu0 0
        %757 = vmatprep.subr.bf16.mxu0 0
        %758 = vmatpush2.bf16.msra.mxu0 0
        %759 = vmatprep.subr.bf16.mxu0 0
        %760 = vmatpush2.bf16.msra.mxu0 0
        %761 = vmatprep.subr.bf16.mxu0 0
        %762 = vmatpush2.bf16.msra.mxu0 0
        %763 = vmatprep.subr.bf16.mxu0 0
        %764 = vmatpush2.bf16.msra.mxu0 0
        %765 = vmatprep.subr.bf16.mxu0 0
        %766 = vmatpush2.bf16.msra.mxu0 0
        %767 = vmatprep.mubr.bf16.mxu0 0
        %768 = vmatmul.mubr.bf16.gmra.mxu0 %v577
        %v769 = vpop.f32.mrf.mxu0
        %v770 = vadd.f32 0.0, %v769
        %v771 = vpop.f32.mrf.mxu0
        %v772 = vpop.f32.mrf.mxu0
        %v773 = vpop.f32.mrf.mxu0
        %774 = vdwg.mxu0
        %v775 = vld [vmem:[%s2] sm:$0xf]
        %v776 = vld [vmem:[%s2 + $0x4] sm:$0xf]
        %v777 = vld [vmem:[%s2 + $0x8] sm:$0xf]
        %v778 = vld [vmem:[%s2 + $0xc] sm:$0xf]
        %v779 = vld [vmem:[%s2 + $0x10] sm:$0xf]
        %v780 = vld [vmem:[%s2 + $0x14] sm:$0xf]
        %v781 = vld [vmem:[%s2 + $0x18] sm:$0xf]
        %v782 = vld [vmem:[%s2 + $0x1c] sm:$0xf]
        %v783 = vld [vmem:[%s2 + $0x20] sm:$0xf]
        %v784 = vld [vmem:[%s2 + $0x24] sm:$0xf]
        %v785 = vld [vmem:[%s2 + $0x28] sm:$0xf]
        %v786 = vld [vmem:[%s2 + $0x2c] sm:$0xf]
        %v787 = vld [vmem:[%s2 + $0x30] sm:$0xf]
        %v788 = vld [vmem:[%s2 + $0x34] sm:$0xf]
        %v789 = vld [vmem:[%s2 + $0x38] sm:$0xf]
        %v790 = vld [vmem:[%s2 + $0x3c] sm:$0xf]
        %v795 = vunpack.c.l.b16 %v775
        %v796 = vunpack.c.l.b16 %v776
        %v797 = vunpack.c.l.b16 %v777
        %v798 = vunpack.c.l.b16 %v778
        %v799 = vpack.c.b16 %v796, %v795
        %v800 = vpack.c.b16 %v798, %v797
        %803 = vmatprep.subr.bf16.mxu0 0
        %804 = vmatpush1.bf16.msra.mxu0 0
        %805 = vmatprep.subr.bf16.mxu0 0
        %806 = vmatpush1.bf16.msra.mxu0 0
        %807 = vmatprep.subr.bf16.mxu0 0
        %808 = vmatpush1.bf16.msra.mxu0 0
        %809 = vmatprep.subr.bf16.mxu0 0
        %810 = vmatpush1.bf16.msra.mxu0 0
        %811 = vmatprep.subr.bf16.mxu0 0
        %812 = vmatpush1.bf16.msra.mxu0 0
        %813 = vmatprep.subr.bf16.mxu0 0
        %814 = vmatpush1.bf16.msra.mxu0 0
        %815 = vmatprep.subr.bf16.mxu0 0
        %816 = vmatpush1.bf16.msra.mxu0 %v800
        %817 = vmatprep.subr.bf16.mxu0 0
        %818 = vmatpush1.bf16.msra.mxu0 %v799
        %819 = vmatprep.subr.bf16.mxu0 0
        %820 = vmatpush2.bf16.msra.mxu0 0
        %821 = vmatprep.subr.bf16.mxu0 0
        %822 = vmatpush2.bf16.msra.mxu0 0
        %823 = vmatprep.subr.bf16.mxu0 0
        %824 = vmatpush2.bf16.msra.mxu0 0
        %825 = vmatprep.subr.bf16.mxu0 0
        %826 = vmatpush2.bf16.msra.mxu0 0
        %827 = vmatprep.subr.bf16.mxu0 0
        %828 = vmatpush2.bf16.msra.mxu0 0
        %829 = vmatprep.subr.bf16.mxu0 0
        %830 = vmatpush2.bf16.msra.mxu0 0
        %831 = vmatprep.subr.bf16.mxu0 0
        %832 = vmatpush2.bf16.msra.mxu0 0
        %833 = vmatprep.subr.bf16.mxu0 0
        %834 = vmatpush2.bf16.msra.mxu0 0
        %835 = vmatprep.mubr.bf16.mxu0 0
        %836 = vmatmul.mubr.bf16.gmra.mxu0 %v577
        %v837 = vpop.f32.mrf.mxu0
        %v838 = vadd.f32 0.0, %v837
        %v839 = vpop.f32.mrf.mxu0
        %v840 = vpop.f32.mrf.mxu0
        %v841 = vpop.f32.mrf.mxu0
        %842 = vdwg.mxu0
        %v847 = vunpack.c.l.b16 %v779
        %v848 = vunpack.c.l.b16 %v780
        %v849 = vunpack.c.l.b16 %v781
        %v850 = vunpack.c.l.b16 %v782
        %v851 = vpack.c.b16 %v848, %v847
        %v852 = vpack.c.b16 %v850, %v849
        %855 = vmatprep.subr.bf16.mxu0 0
        %856 = vmatpush1.bf16.msra.mxu0 0
        %857 = vmatprep.subr.bf16.mxu0 0
        %858 = vmatpush1.bf16.msra.mxu0 0
        %859 = vmatprep.subr.bf16.mxu0 0
        %860 = vmatpush1.bf16.msra.mxu0 0
        %861 = vmatprep.subr.bf16.mxu0 0
        %862 = vmatpush1.bf16.msra.mxu0 0
        %863 = vmatprep.subr.bf16.mxu0 0
        %864 = vmatpush1.bf16.msra.mxu0 0
        %865 = vmatprep.subr.bf16.mxu0 0
        %866 = vmatpush1.bf16.msra.mxu0 0
        %867 = vmatprep.subr.bf16.mxu0 0
        %868 = vmatpush1.bf16.msra.mxu0 %v852
        %869 = vmatprep.subr.bf16.mxu0 0
        %870 = vmatpush1.bf16.msra.mxu0 %v851
        %871 = vmatprep.subr.bf16.mxu0 0
        %872 = vmatpush2.bf16.msra.mxu0 0
        %873 = vmatprep.subr.bf16.mxu0 0
        %874 = vmatpush2.bf16.msra.mxu0 0
        %875 = vmatprep.subr.bf16.mxu0 0
        %876 = vmatpush2.bf16.msra.mxu0 0
        %877 = vmatprep.subr.bf16.mxu0 0
        %878 = vmatpush2.bf16.msra.mxu0 0
        %879 = vmatprep.subr.bf16.mxu0 0
        %880 = vmatpush2.bf16.msra.mxu0 0
        %881 = vmatprep.subr.bf16.mxu0 0
        %882 = vmatpush2.bf16.msra.mxu0 0
        %883 = vmatprep.subr.bf16.mxu0 0
        %884 = vmatpush2.bf16.msra.mxu0 0
        %885 = vmatprep.subr.bf16.mxu0 0
        %886 = vmatpush2.bf16.msra.mxu0 0
        %887 = vmatprep.mubr.bf16.mxu0 0
        %888 = vmatmul.mubr.bf16.gmra.mxu0 %v577
        %v889 = vpop.f32.mrf.mxu0
        %v890 = vadd.f32 0.0, %v889
        %v891 = vpop.f32.mrf.mxu0
        %v892 = vpop.f32.mrf.mxu0
        %v893 = vpop.f32.mrf.mxu0
        %894 = vdwg.mxu0
        %v899 = vunpack.c.l.b16 %v783
        %v900 = vunpack.c.l.b16 %v784
        %v901 = vunpack.c.l.b16 %v785
        %v902 = vunpack.c.l.b16 %v786
        %v903 = vpack.c.b16 %v900, %v899
        %v904 = vpack.c.b16 %v902, %v901
        %907 = vmatprep.subr.bf16.mxu0 0
        %908 = vmatpush1.bf16.msra.mxu0 0
        %909 = vmatprep.subr.bf16.mxu0 0
        %910 = vmatpush1.bf16.msra.mxu0 0
        %911 = vmatprep.subr.bf16.mxu0 0
        %912 = vmatpush1.bf16.msra.mxu0 0
        %913 = vmatprep.subr.bf16.mxu0 0
        %914 = vmatpush1.bf16.msra.mxu0 0
        %915 = vmatprep.subr.bf16.mxu0 0
        %916 = vmatpush1.bf16.msra.mxu0 0
        %917 = vmatprep.subr.bf16.mxu0 0
        %918 = vmatpush1.bf16.msra.mxu0 0
        %919 = vmatprep.subr.bf16.mxu0 0
        %920 = vmatpush1.bf16.msra.mxu0 %v904
        %921 = vmatprep.subr.bf16.mxu0 0
        %922 = vmatpush1.bf16.msra.mxu0 %v903
        %923 = vmatprep.subr.bf16.mxu0 0
        %924 = vmatpush2.bf16.msra.mxu0 0
        %925 = vmatprep.subr.bf16.mxu0 0
        %926 = vmatpush2.bf16.msra.mxu0 0
        %927 = vmatprep.subr.bf16.mxu0 0
        %928 = vmatpush2.bf16.msra.mxu0 0
        %929 = vmatprep.subr.bf16.mxu0 0
        %930 = vmatpush2.bf16.msra.mxu0 0
        %931 = vmatprep.subr.bf16.mxu0 0
        %932 = vmatpush2.bf16.msra.mxu0 0
        %933 = vmatprep.subr.bf16.mxu0 0
        %934 = vmatpush2.bf16.msra.mxu0 0
        %935 = vmatprep.subr.bf16.mxu0 0
        %936 = vmatpush2.bf16.msra.mxu0 0
        %937 = vmatprep.subr.bf16.mxu0 0
        %938 = vmatpush2.bf16.msra.mxu0 0
        %939 = vmatprep.mubr.bf16.mxu0 0
        %940 = vmatmul.mubr.bf16.gmra.mxu0 %v577
        %v941 = vpop.f32.mrf.mxu0
        %v942 = vadd.f32 0.0, %v941
        %v943 = vpop.f32.mrf.mxu0
        %v944 = vpop.f32.mrf.mxu0
        %v945 = vpop.f32.mrf.mxu0
        %946 = vdwg.mxu0
        %v951 = vunpack.c.l.b16 %v787
        %v952 = vunpack.c.l.b16 %v788
        %v953 = vunpack.c.l.b16 %v789
        %v954 = vunpack.c.l.b16 %v790
        %v955 = vpack.c.b16 %v952, %v951
        %v956 = vpack.c.b16 %v954, %v953
        %959 = vmatprep.subr.bf16.mxu0 0
        %960 = vmatpush1.bf16.msra.mxu0 0
        %961 = vmatprep.subr.bf16.mxu0 0
        %962 = vmatpush1.bf16.msra.mxu0 0
        %963 = vmatprep.subr.bf16.mxu0 0
        %964 = vmatpush1.bf16.msra.mxu0 0
        %965 = vmatprep.subr.bf16.mxu0 0
        %966 = vmatpush1.bf16.msra.mxu0 0
        %967 = vmatprep.subr.bf16.mxu0 0
        %968 = vmatpush1.bf16.msra.mxu0 0
        %969 = vmatprep.subr.bf16.mxu0 0
        %970 = vmatpush1.bf16.msra.mxu0 0
        %971 = vmatprep.subr.bf16.mxu0 0
        %972 = vmatpush1.bf16.msra.mxu0 %v956
        %973 = vmatprep.subr.bf16.mxu0 0
        %974 = vmatpush1.bf16.msra.mxu0 %v955
        %975 = vmatprep.subr.bf16.mxu0 0
        %976 = vmatpush2.bf16.msra.mxu0 0
        %977 = vmatprep.subr.bf16.mxu0 0
        %978 = vmatpush2.bf16.msra.mxu0 0
        %979 = vmatprep.subr.bf16.mxu0 0
        %980 = vmatpush2.bf16.msra.mxu0 0
        %981 = vmatprep.subr.bf16.mxu0 0
        %982 = vmatpush2.bf16.msra.mxu0 0
        %983 = vmatprep.subr.bf16.mxu0 0
        %984 = vmatpush2.bf16.msra.mxu0 0
        %985 = vmatprep.subr.bf16.mxu0 0
        %986 = vmatpush2.bf16.msra.mxu0 0
        %987 = vmatprep.subr.bf16.mxu0 0
        %988 = vmatpush2.bf16.msra.mxu0 0
        %989 = vmatprep.subr.bf16.mxu0 0
        %990 = vmatpush2.bf16.msra.mxu0 0
        %991 = vmatprep.mubr.bf16.mxu0 0
        %992 = vmatmul.mubr.bf16.gmra.mxu0 %v577
        %v993 = vpop.f32.mrf.mxu0
        %v994 = vadd.f32 0.0, %v993
        %v995 = vpop.f32.mrf.mxu0
        %v996 = vpop.f32.mrf.mxu0
        %v997 = vpop.f32.mrf.mxu0
        %998 = vdwg.mxu0
        %v999 = vld [vmem:[%s3] sm:$0xf]
        %v1000 = vld [vmem:[%s3 + $0x4] sm:$0xf]
        %v1001 = vld [vmem:[%s3 + $0x8] sm:$0xf]
        %v1002 = vld [vmem:[%s3 + $0xc] sm:$0xf]
        %v1003 = vld [vmem:[%s3 + $0x10] sm:$0xf]
        %v1004 = vld [vmem:[%s3 + $0x14] sm:$0xf]
        %v1005 = vld [vmem:[%s3 + $0x18] sm:$0xf]
        %v1006 = vld [vmem:[%s3 + $0x1c] sm:$0xf]
        %v1007 = vld [vmem:[%s3 + $0x20] sm:$0xf]
        %v1008 = vld [vmem:[%s3 + $0x24] sm:$0xf]
        %v1009 = vld [vmem:[%s3 + $0x28] sm:$0xf]
        %v1010 = vld [vmem:[%s3 + $0x2c] sm:$0xf]
        %v1011 = vld [vmem:[%s3 + $0x30] sm:$0xf]
        %v1012 = vld [vmem:[%s3 + $0x34] sm:$0xf]
        %v1013 = vld [vmem:[%s3 + $0x38] sm:$0xf]
        %v1014 = vld [vmem:[%s3 + $0x3c] sm:$0xf]
        %v1019 = vunpack.c.l.b16 %v999
        %v1020 = vunpack.c.l.b16 %v1000
        %v1021 = vunpack.c.l.b16 %v1001
        %v1022 = vunpack.c.l.b16 %v1002
        %v1023 = vpack.c.b16 %v1020, %v1019
        %v1024 = vpack.c.b16 %v1022, %v1021
        %1027 = vmatprep.subr.bf16.mxu0 0
        %1028 = vmatpush1.bf16.msra.mxu0 0
        %1029 = vmatprep.subr.bf16.mxu0 0
        %1030 = vmatpush1.bf16.msra.mxu0 0
        %1031 = vmatprep.subr.bf16.mxu0 0
        %1032 = vmatpush1.bf16.msra.mxu0 0
        %1033 = vmatprep.subr.bf16.mxu0 0
        %1034 = vmatpush1.bf16.msra.mxu0 0
        %1035 = vmatprep.subr.bf16.mxu0 0
        %1036 = vmatpush1.bf16.msra.mxu0 0
        %1037 = vmatprep.subr.bf16.mxu0 0
        %1038 = vmatpush1.bf16.msra.mxu0 0
        %1039 = vmatprep.subr.bf16.mxu0 0
        %1040 = vmatpush1.bf16.msra.mxu0 %v1024
        %1041 = vmatprep.subr.bf16.mxu0 0
        %1042 = vmatpush1.bf16.msra.mxu0 %v1023
        %1043 = vmatprep.subr.bf16.mxu0 0
        %1044 = vmatpush2.bf16.msra.mxu0 0
        %1045 = vmatprep.subr.bf16.mxu0 0
        %1046 = vmatpush2.bf16.msra.mxu0 0
        %1047 = vmatprep.subr.bf16.mxu0 0
        %1048 = vmatpush2.bf16.msra.mxu0 0
        %1049 = vmatprep.subr.bf16.mxu0 0
        %1050 = vmatpush2.bf16.msra.mxu0 0
        %1051 = vmatprep.subr.bf16.mxu0 0
        %1052 = vmatpush2.bf16.msra.mxu0 0
        %1053 = vmatprep.subr.bf16.mxu0 0
        %1054 = vmatpush2.bf16.msra.mxu0 0
        %1055 = vmatprep.subr.bf16.mxu0 0
        %1056 = vmatpush2.bf16.msra.mxu0 0
        %1057 = vmatprep.subr.bf16.mxu0 0
        %1058 = vmatpush2.bf16.msra.mxu0 0
        %1059 = vmatprep.mubr.bf16.mxu0 0
        %1060 = vmatmul.mubr.bf16.gmra.mxu0 %v577
        %v1061 = vpop.f32.mrf.mxu0
        %v1062 = vadd.f32 0.0, %v1061
        %v1063 = vpop.f32.mrf.mxu0
        %v1064 = vpop.f32.mrf.mxu0
        %v1065 = vpop.f32.mrf.mxu0
        %1066 = vdwg.mxu0
        %v1071 = vunpack.c.l.b16 %v1003
        %v1072 = vunpack.c.l.b16 %v1004
        %v1073 = vunpack.c.l.b16 %v1005
        %v1074 = vunpack.c.l.b16 %v1006
        %v1075 = vpack.c.b16 %v1072, %v1071
        %v1076 = vpack.c.b16 %v1074, %v1073
        %1079 = vmatprep.subr.bf16.mxu0 0
        %1080 = vmatpush1.bf16.msra.mxu0 0
        %1081 = vmatprep.subr.bf16.mxu0 0
        %1082 = vmatpush1.bf16.msra.mxu0 0
        %1083 = vmatprep.subr.bf16.mxu0 0
        %1084 = vmatpush1.bf16.msra.mxu0 0
        %1085 = vmatprep.subr.bf16.mxu0 0
        %1086 = vmatpush1.bf16.msra.mxu0 0
        %1087 = vmatprep.subr.bf16.mxu0 0
        %1088 = vmatpush1.bf16.msra.mxu0 0
        %1089 = vmatprep.subr.bf16.mxu0 0
        %1090 = vmatpush1.bf16.msra.mxu0 0
        %1091 = vmatprep.subr.bf16.mxu0 0
        %1092 = vmatpush1.bf16.msra.mxu0 %v1076
        %1093 = vmatprep.subr.bf16.mxu0 0
        %1094 = vmatpush1.bf16.msra.mxu0 %v1075
        %1095 = vmatprep.subr.bf16.mxu0 0
        %1096 = vmatpush2.bf16.msra.mxu0 0
        %1097 = vmatprep.subr.bf16.mxu0 0
        %1098 = vmatpush2.bf16.msra.mxu0 0
        %1099 = vmatprep.subr.bf16.mxu0 0
        %1100 = vmatpush2.bf16.msra.mxu0 0
        %1101 = vmatprep.subr.bf16.mxu0 0
        %1102 = vmatpush2.bf16.msra.mxu0 0
        %1103 = vmatprep.subr.bf16.mxu0 0
        %1104 = vmatpush2.bf16.msra.mxu0 0
        %1105 = vmatprep.subr.bf16.mxu0 0
        %1106 = vmatpush2.bf16.msra.mxu0 0
        %1107 = vmatprep.subr.bf16.mxu0 0
        %1108 = vmatpush2.bf16.msra.mxu0 0
        %1109 = vmatprep.subr.bf16.mxu0 0
        %1110 = vmatpush2.bf16.msra.mxu0 0
        %1111 = vmatprep.mubr.bf16.mxu0 0
        %1112 = vmatmul.mubr.bf16.gmra.mxu0 %v577
        %v1113 = vpop.f32.mrf.mxu0
        %v1114 = vadd.f32 0.0, %v1113
        %v1115 = vpop.f32.mrf.mxu0
        %v1116 = vpop.f32.mrf.mxu0
        %v1117 = vpop.f32.mrf.mxu0
        %1118 = vdwg.mxu0
        %v1123 = vunpack.c.l.b16 %v1007
        %v1124 = vunpack.c.l.b16 %v1008
        %v1125 = vunpack.c.l.b16 %v1009
        %v1126 = vunpack.c.l.b16 %v1010
        %v1127 = vpack.c.b16 %v1124, %v1123
        %v1128 = vpack.c.b16 %v1126, %v1125
        %1131 = vmatprep.subr.bf16.mxu0 0
        %1132 = vmatpush1.bf16.msra.mxu0 0
        %1133 = vmatprep.subr.bf16.mxu0 0
        %1134 = vmatpush1.bf16.msra.mxu0 0
        %1135 = vmatprep.subr.bf16.mxu0 0
        %1136 = vmatpush1.bf16.msra.mxu0 0
        %1137 = vmatprep.subr.bf16.mxu0 0
        %1138 = vmatpush1.bf16.msra.mxu0 0
        %1139 = vmatprep.subr.bf16.mxu0 0
        %1140 = vmatpush1.bf16.msra.mxu0 0
        %1141 = vmatprep.subr.bf16.mxu0 0
        %1142 = vmatpush1.bf16.msra.mxu0 0
        %1143 = vmatprep.subr.bf16.mxu0 0
        %1144 = vmatpush1.bf16.msra.mxu0 %v1128
        %1145 = vmatprep.subr.bf16.mxu0 0
        %1146 = vmatpush1.bf16.msra.mxu0 %v1127
        %1147 = vmatprep.subr.bf16.mxu0 0
        %1148 = vmatpush2.bf16.msra.mxu0 0
        %1149 = vmatprep.subr.bf16.mxu0 0
        %1150 = vmatpush2.bf16.msra.mxu0 0
        %1151 = vmatprep.subr.bf16.mxu0 0
        %1152 = vmatpush2.bf16.msra.mxu0 0
        %1153 = vmatprep.subr.bf16.mxu0 0
        %1154 = vmatpush2.bf16.msra.mxu0 0
        %1155 = vmatprep.subr.bf16.mxu0 0
        %1156 = vmatpush2.bf16.msra.mxu0 0
        %1157 = vmatprep.subr.bf16.mxu0 0
        %1158 = vmatpush2.bf16.msra.mxu0 0
        %1159 = vmatprep.subr.bf16.mxu0 0
        %1160 = vmatpush2.bf16.msra.mxu0 0
        %1161 = vmatprep.subr.bf16.mxu0 0
        %1162 = vmatpush2.bf16.msra.mxu0 0
        %1163 = vmatprep.mubr.bf16.mxu0 0
        %1164 = vmatmul.mubr.bf16.gmra.mxu0 %v577
        %v1165 = vpop.f32.mrf.mxu0
        %v1166 = vadd.f32 0.0, %v1165
        %v1167 = vpop.f32.mrf.mxu0
        %v1168 = vpop.f32.mrf.mxu0
        %v1169 = vpop.f32.mrf.mxu0
        %1170 = vdwg.mxu0
        %v1175 = vunpack.c.l.b16 %v1011
        %v1176 = vunpack.c.l.b16 %v1012
        %v1177 = vunpack.c.l.b16 %v1013
        %v1178 = vunpack.c.l.b16 %v1014
        %v1179 = vpack.c.b16 %v1176, %v1175
        %v1180 = vpack.c.b16 %v1178, %v1177
        %1183 = vmatprep.subr.bf16.mxu0 0
        %1184 = vmatpush1.bf16.msra.mxu0 0
        %1185 = vmatprep.subr.bf16.mxu0 0
        %1186 = vmatpush1.bf16.msra.mxu0 0
        %1187 = vmatprep.subr.bf16.mxu0 0
        %1188 = vmatpush1.bf16.msra.mxu0 0
        %1189 = vmatprep.subr.bf16.mxu0 0
        %1190 = vmatpush1.bf16.msra.mxu0 0
        %1191 = vmatprep.subr.bf16.mxu0 0
        %1192 = vmatpush1.bf16.msra.mxu0 0
        %1193 = vmatprep.subr.bf16.mxu0 0
        %1194 = vmatpush1.bf16.msra.mxu0 0
        %1195 = vmatprep.subr.bf16.mxu0 0
        %1196 = vmatpush1.bf16.msra.mxu0 %v1180
        %1197 = vmatprep.subr.bf16.mxu0 0
        %1198 = vmatpush1.bf16.msra.mxu0 %v1179
        %1199 = vmatprep.subr.bf16.mxu0 0
        %1200 = vmatpush2.bf16.msra.mxu0 0
        %1201 = vmatprep.subr.bf16.mxu0 0
        %1202 = vmatpush2.bf16.msra.mxu0 0
        %1203 = vmatprep.subr.bf16.mxu0 0
        %1204 = vmatpush2.bf16.msra.mxu0 0
        %1205 = vmatprep.subr.bf16.mxu0 0
        %1206 = vmatpush2.bf16.msra.mxu0 0
        %1207 = vmatprep.subr.bf16.mxu0 0
        %1208 = vmatpush2.bf16.msra.mxu0 0
        %1209 = vmatprep.subr.bf16.mxu0 0
        %1210 = vmatpush2.bf16.msra.mxu0 0
        %1211 = vmatprep.subr.bf16.mxu0 0
        %1212 = vmatpush2.bf16.msra.mxu0 0
        %1213 = vmatprep.subr.bf16.mxu0 0
        %1214 = vmatpush2.bf16.msra.mxu0 0
        %1215 = vmatprep.mubr.bf16.mxu0 0
        %1216 = vmatmul.mubr.bf16.gmra.mxu0 %v577
        %v1217 = vpop.f32.mrf.mxu0
        %v1218 = vadd.f32 0.0, %v1217
        %v1219 = vpop.f32.mrf.mxu0
        %v1220 = vpop.f32.mrf.mxu0
        %v1221 = vpop.f32.mrf.mxu0
        %1222 = vdwg.mxu0
        %v1223 = vmul.f32 %v614, 0.35355338
        %v1224 = vmul.f32 %v666, 0.35355338
        %v1225 = vmul.f32 %v718, 0.35355338
        %v1226 = vmul.f32 %v770, 0.35355338
        %v1227 = vpack.c.bf16 %v1223, %v1223
        %v1228 = vpack.c.bf16 %v1224, %v1224
        %v1229 = vpack.c.bf16 %v1225, %v1225
        %v1230 = vpack.c.bf16 %v1226, %v1226
        %v1231 = vpack.c.bf16 %v838, %v838
        %v1232 = vpack.c.bf16 %v890, %v890
        %v1233 = vpack.c.bf16 %v942, %v942
        %v1234 = vpack.c.bf16 %v994, %v994
        %vm1235 = vcmask 64512
        %v1237 = vsel %vm1235, %v1227, 0
        %v1240 = vsel %vm1235, %v1231, 0
        %1242 = vmatprep.subr.bf16.mxu0 0
        %1243 = vmatpush1.bf16.xpose.msra.mxu0 0
        %1244 = vmatprep.subr.bf16.mxu0 0
        %1245 = vmatpush1.bf16.xpose.msra.mxu0 0
        %1246 = vmatprep.subr.bf16.mxu0 0
        %1247 = vmatpush1.bf16.xpose.msra.mxu0 0
        %1248 = vmatprep.subr.bf16.mxu0 0
        %1249 = vmatpush1.bf16.xpose.msra.mxu0 0
        %1250 = vmatprep.subr.bf16.mxu0 0
        %1251 = vmatpush1.bf16.xpose.msra.mxu0 0
        %1252 = vmatprep.subr.bf16.mxu0 0
        %1253 = vmatpush1.bf16.xpose.msra.mxu0 0
        %1254 = vmatprep.subr.bf16.mxu0 0
        %1255 = vmatpush1.bf16.xpose.msra.mxu0 0
        %1256 = vmatprep.subr.bf16.mxu0 0
        %1257 = vmatpush1.bf16.xpose.msra.mxu0 %v1240
        %1258 = vmatprep.subr.bf16.mxu0 0
        %1259 = vmatpush2.bf16.xpose.msra.mxu0 0
        %1260 = vmatprep.subr.bf16.mxu0 0
        %1261 = vmatpush2.bf16.xpose.msra.mxu0 0
        %1262 = vmatprep.subr.bf16.mxu0 0
        %1263 = vmatpush2.bf16.xpose.msra.mxu0 0
        %1264 = vmatprep.subr.bf16.mxu0 0
        %1265 = vmatpush2.bf16.xpose.msra.mxu0 0
        %1266 = vmatprep.subr.bf16.mxu0 0
        %1267 = vmatpush2.bf16.xpose.msra.mxu0 0
        %1268 = vmatprep.subr.bf16.mxu0 0
        %1269 = vmatpush2.bf16.xpose.msra.mxu0 0
        %1270 = vmatprep.subr.bf16.mxu0 0
        %1271 = vmatpush2.bf16.xpose.msra.mxu0 0
        %1272 = vmatprep.subr.bf16.mxu0 0
        %1273 = vmatpush2.bf16.xpose.msra.mxu0 0
        %1274 = vmatprep.mubr.bf16.mxu0 0
        %1275 = vmatmul.mubr.bf16.gmra.mxu0 %v1237
        %v1276 = vpop.f32.mrf.mxu0
        %v1277 = vadd.f32 0.0, %v1276
        %v1278 = vpop.f32.mrf.mxu0
        %v1279 = vpop.f32.mrf.mxu0
        %v1280 = vpop.f32.mrf.mxu0
        %1281 = vdwg.mxu0
        %v1283 = vsel %vm1235, %v1228, 0
        %v1286 = vsel %vm1235, %v1232, 0
        %1288 = vmatprep.subr.bf16.mxu0 0
        %1289 = vmatpush1.bf16.xpose.msra.mxu0 0
        %1290 = vmatprep.subr.bf16.mxu0 0
        %1291 = vmatpush1.bf16.xpose.msra.mxu0 0
        %1292 = vmatprep.subr.bf16.mxu0 0
        %1293 = vmatpush1.bf16.xpose.msra.mxu0 0
        %1294 = vmatprep.subr.bf16.mxu0 0
        %1295 = vmatpush1.bf16.xpose.msra.mxu0 0
        %1296 = vmatprep.subr.bf16.mxu0 0
        %1297 = vmatpush1.bf16.xpose.msra.mxu0 0
        %1298 = vmatprep.subr.bf16.mxu0 0
        %1299 = vmatpush1.bf16.xpose.msra.mxu0 0
        %1300 = vmatprep.subr.bf16.mxu0 0
        %1301 = vmatpush1.bf16.xpose.msra.mxu0 0
        %1302 = vmatprep.subr.bf16.mxu0 0
        %1303 = vmatpush1.bf16.xpose.msra.mxu0 %v1286
        %1304 = vmatprep.subr.bf16.mxu0 0
        %1305 = vmatpush2.bf16.xpose.msra.mxu0 0
        %1306 = vmatprep.subr.bf16.mxu0 0
        %1307 = vmatpush2.bf16.xpose.msra.mxu0 0
        %1308 = vmatprep.subr.bf16.mxu0 0
        %1309 = vmatpush2.bf16.xpose.msra.mxu0 0
        %1310 = vmatprep.subr.bf16.mxu0 0
        %1311 = vmatpush2.bf16.xpose.msra.mxu0 0
        %1312 = vmatprep.subr.bf16.mxu0 0
        %1313 = vmatpush2.bf16.xpose.msra.mxu0 0
        %1314 = vmatprep.subr.bf16.mxu0 0
        %1315 = vmatpush2.bf16.xpose.msra.mxu0 0
        %1316 = vmatprep.subr.bf16.mxu0 0
        %1317 = vmatpush2.bf16.xpose.msra.mxu0 0
        %1318 = vmatprep.subr.bf16.mxu0 0
        %1319 = vmatpush2.bf16.xpose.msra.mxu0 0
        %1320 = vmatprep.mubr.bf16.mxu0 0
        %1321 = vmatmul.mubr.bf16.gmra.mxu0 %v1283
        %v1322 = vpop.f32.mrf.mxu0
        %v1323 = vadd.f32 0.0, %v1322
        %v1324 = vpop.f32.mrf.mxu0
        %v1325 = vpop.f32.mrf.mxu0
        %v1326 = vpop.f32.mrf.mxu0
        %1327 = vdwg.mxu0
        %v1329 = vsel %vm1235, %v1229, 0
        %v1332 = vsel %vm1235, %v1233, 0
        %1334 = vmatprep.subr.bf16.mxu0 0
        %1335 = vmatpush1.bf16.xpose.msra.mxu0 0
        %1336 = vmatprep.subr.bf16.mxu0 0
        %1337 = vmatpush1.bf16.xpose.msra.mxu0 0
        %1338 = vmatprep.subr.bf16.mxu0 0
        %1339 = vmatpush1.bf16.xpose.msra.mxu0 0
        %1340 = vmatprep.subr.bf16.mxu0 0
        %1341 = vmatpush1.bf16.xpose.msra.mxu0 0
        %1342 = vmatprep.subr.bf16.mxu0 0
        %1343 = vmatpush1.bf16.xpose.msra.mxu0 0
        %1344 = vmatprep.subr.bf16.mxu0 0
        %1345 = vmatpush1.bf16.xpose.msra.mxu0 0
        %1346 = vmatprep.subr.bf16.mxu0 0
        %1347 = vmatpush1.bf16.xpose.msra.mxu0 0
        %1348 = vmatprep.subr.bf16.mxu0 0
        %1349 = vmatpush1.bf16.xpose.msra.mxu0 %v1332
        %1350 = vmatprep.subr.bf16.mxu0 0
        %1351 = vmatpush2.bf16.xpose.msra.mxu0 0
        %1352 = vmatprep.subr.bf16.mxu0 0
        %1353 = vmatpush2.bf16.xpose.msra.mxu0 0
        %1354 = vmatprep.subr.bf16.mxu0 0
        %1355 = vmatpush2.bf16.xpose.msra.mxu0 0
        %1356 = vmatprep.subr.bf16.mxu0 0
        %1357 = vmatpush2.bf16.xpose.msra.mxu0 0
        %1358 = vmatprep.subr.bf16.mxu0 0
        %1359 = vmatpush2.bf16.xpose.msra.mxu0 0
        %1360 = vmatprep.subr.bf16.mxu0 0
        %1361 = vmatpush2.bf16.xpose.msra.mxu0 0
        %1362 = vmatprep.subr.bf16.mxu0 0
        %1363 = vmatpush2.bf16.xpose.msra.mxu0 0
        %1364 = vmatprep.subr.bf16.mxu0 0
        %1365 = vmatpush2.bf16.xpose.msra.mxu0 0
        %1366 = vmatprep.mubr.bf16.mxu0 0
        %1367 = vmatmul.mubr.bf16.gmra.mxu0 %v1329
        %v1368 = vpop.f32.mrf.mxu0
        %v1369 = vadd.f32 0.0, %v1368
        %v1370 = vpop.f32.mrf.mxu0
        %v1371 = vpop.f32.mrf.mxu0
        %v1372 = vpop.f32.mrf.mxu0
        %1373 = vdwg.mxu0
        %v1375 = vsel %vm1235, %v1230, 0
        %v1378 = vsel %vm1235, %v1234, 0
        %1380 = vmatprep.subr.bf16.mxu0 0
        %1381 = vmatpush1.bf16.xpose.msra.mxu0 0
        %1382 = vmatprep.subr.bf16.mxu0 0
        %1383 = vmatpush1.bf16.xpose.msra.mxu0 0
        %1384 = vmatprep.subr.bf16.mxu0 0
        %1385 = vmatpush1.bf16.xpose.msra.mxu0 0
        %1386 = vmatprep.subr.bf16.mxu0 0
        %1387 = vmatpush1.bf16.xpose.msra.mxu0 0
        %1388 = vmatprep.subr.bf16.mxu0 0
        %1389 = vmatpush1.bf16.xpose.msra.mxu0 0
        %1390 = vmatprep.subr.bf16.mxu0 0
        %1391 = vmatpush1.bf16.xpose.msra.mxu0 0
        %1392 = vmatprep.subr.bf16.mxu0 0
        %1393 = vmatpush1.bf16.xpose.msra.mxu0 0
        %1394 = vmatprep.subr.bf16.mxu0 0
        %1395 = vmatpush1.bf16.xpose.msra.mxu0 %v1378
        %1396 = vmatprep.subr.bf16.mxu0 0
        %1397 = vmatpush2.bf16.xpose.msra.mxu0 0
        %1398 = vmatprep.subr.bf16.mxu0 0
        %1399 = vmatpush2.bf16.xpose.msra.mxu0 0
        %1400 = vmatprep.subr.bf16.mxu0 0
        %1401 = vmatpush2.bf16.xpose.msra.mxu0 0
        %1402 = vmatprep.subr.bf16.mxu0 0
        %1403 = vmatpush2.bf16.xpose.msra.mxu0 0
        %1404 = vmatprep.subr.bf16.mxu0 0
        %1405 = vmatpush2.bf16.xpose.msra.mxu0 0
        %1406 = vmatprep.subr.bf16.mxu0 0
        %1407 = vmatpush2.bf16.xpose.msra.mxu0 0
        %1408 = vmatprep.subr.bf16.mxu0 0
        %1409 = vmatpush2.bf16.xpose.msra.mxu0 0
        %1410 = vmatprep.subr.bf16.mxu0 0
        %1411 = vmatpush2.bf16.xpose.msra.mxu0 0
        %1412 = vmatprep.mubr.bf16.mxu0 0
        %1413 = vmatmul.mubr.bf16.gmra.mxu0 %v1375
        %v1414 = vpop.f32.mrf.mxu0
        %v1415 = vadd.f32 0.0, %v1414
        %v1416 = vpop.f32.mrf.mxu0
        %v1417 = vpop.f32.mrf.mxu0
        %v1418 = vpop.f32.mrf.mxu0
        %1419 = vdwg.mxu0
        %v1420 = vsel %vm1235, %v1277, -inf
        %1421 = vmax.xlane.f32.xlu0 %v1420
        %v1422 = vpop.xlane.xlu0 %1421
        %v1423 = vsel %vm1235, %v1323, -inf
        %1424 = vmax.xlane.f32.xlu0 %v1423
        %v1425 = vpop.xlane.xlu0 %1424
        %v1426 = vsel %vm1235, %v1369, -inf
        %1427 = vmax.xlane.f32.xlu0 %v1426
        %v1428 = vpop.xlane.xlu0 %1427
        %v1429 = vsel %vm1235, %v1415, -inf
        %1430 = vmax.xlane.f32.xlu0 %v1429
        %v1431 = vpop.xlane.xlu0 %1430
        %v1432 = vsub.f32 %v1277, %v1422
        %v1433 = vsub.f32 %v1323, %v1425
        %v1434 = vsub.f32 %v1369, %v1428
        %v1435 = vsub.f32 %v1415, %v1431
        %v1436 = vmul.f32 %v1432, 1.442695
        %v1437 = vpow.pop %v1436
        %v1438 = vmul.f32 %v1433, 1.442695
        %v1439 = vpow.pop %v1438
        %v1440 = vmul.f32 %v1434, 1.442695
        %v1441 = vpow.pop %v1440
        %v1442 = vmul.f32 %v1435, 1.442695
        %v1443 = vpow.pop %v1442
        %v1444 = vsel %vm1235, %v1437, 0.0
        %1445 = vadd.xlane.f32.xlu0 %v1444
        %v1446 = vpop.xlane.xlu0 %1445
        %v1447 = vsel %vm1235, %v1439, 0.0
        %1448 = vadd.xlane.f32.xlu0 %v1447
        %v1449 = vpop.xlane.xlu0 %1448
        %v1450 = vsel %vm1235, %v1441, 0.0
        %1451 = vadd.xlane.f32.xlu0 %v1450
        %v1452 = vpop.xlane.xlu0 %1451
        %v1453 = vsel %vm1235, %v1443, 0.0
        %1454 = vadd.xlane.f32.xlu0 %v1453
        %v1455 = vpop.xlane.xlu0 %1454
        %v1456 = vrcp.pop %v1446
        %v1457 = vrcp.pop %v1449
        %v1458 = vrcp.pop %v1452
        %v1459 = vrcp.pop %v1455
        %v1460 = vmul.f32 %v1437, %v1456
        %v1461 = vmul.f32 %v1439, %v1457
        %v1462 = vmul.f32 %v1441, %v1458
        %v1463 = vmul.f32 %v1443, %v1459
        %v1464 = vpack.c.bf16 %v1460, %v1460
        %v1465 = vpack.c.bf16 %v1461, %v1461
        %v1466 = vpack.c.bf16 %v1462, %v1462
        %v1467 = vpack.c.bf16 %v1463, %v1463
        %v1468 = vpack.c.bf16 %v1062, %v1062
        %v1469 = vpack.c.bf16 %v1114, %v1114
        %v1470 = vpack.c.bf16 %v1166, %v1166
        %v1471 = vpack.c.bf16 %v1218, %v1218
        %v1473 = vsel %vm1235, %v1464, 0
        %vm1475 = vcmask 1043456
        %v1477 = vsel %vm1475, %v1468, 0
        %1479 = vmatprep.subr.bf16.mxu0 0
        %1480 = vmatpush1.bf16.msra.mxu0 0
        %1481 = vmatprep.subr.bf16.mxu0 0
        %1482 = vmatpush1.bf16.msra.mxu0 0
        %1483 = vmatprep.subr.bf16.mxu0 0
        %1484 = vmatpush1.bf16.msra.mxu0 0
        %1485 = vmatprep.subr.bf16.mxu0 0
        %1486 = vmatpush1.bf16.msra.mxu0 0
        %1487 = vmatprep.subr.bf16.mxu0 0
        %1488 = vmatpush1.bf16.msra.mxu0 0
        %1489 = vmatprep.subr.bf16.mxu0 0
        %1490 = vmatpush1.bf16.msra.mxu0 0
        %1491 = vmatprep.subr.bf16.mxu0 0
        %1492 = vmatpush1.bf16.msra.mxu0 0
        %1493 = vmatprep.subr.bf16.mxu0 0
        %1494 = vmatpush1.bf16.msra.mxu0 %v1477
        %1495 = vmatprep.subr.bf16.mxu0 0
        %1496 = vmatpush2.bf16.msra.mxu0 0
        %1497 = vmatprep.subr.bf16.mxu0 0
        %1498 = vmatpush2.bf16.msra.mxu0 0
        %1499 = vmatprep.subr.bf16.mxu0 0
        %1500 = vmatpush2.bf16.msra.mxu0 0
        %1501 = vmatprep.subr.bf16.mxu0 0
        %1502 = vmatpush2.bf16.msra.mxu0 0
        %1503 = vmatprep.subr.bf16.mxu0 0
        %1504 = vmatpush2.bf16.msra.mxu0 0
        %1505 = vmatprep.subr.bf16.mxu0 0
        %1506 = vmatpush2.bf16.msra.mxu0 0
        %1507 = vmatprep.subr.bf16.mxu0 0
        %1508 = vmatpush2.bf16.msra.mxu0 0
        %1509 = vmatprep.subr.bf16.mxu0 0
        %1510 = vmatpush2.bf16.msra.mxu0 0
        %1511 = vmatprep.mubr.bf16.mxu0 0
        %1512 = vmatmul.mubr.bf16.gmra.mxu0 %v1473
        %v1513 = vpop.f32.mrf.mxu0
        %v1514 = vadd.f32 0.0, %v1513
        %v1515 = vpop.f32.mrf.mxu0
        %v1516 = vpop.f32.mrf.mxu0
        %v1517 = vpop.f32.mrf.mxu0
        %1518 = vdwg.mxu0
        %v1520 = vsel %vm1235, %v1465, 0
        %v1523 = vsel %vm1475, %v1469, 0
        %1525 = vmatprep.subr.bf16.mxu0 0
        %1526 = vmatpush1.bf16.msra.mxu0 0
        %1527 = vmatprep.subr.bf16.mxu0 0
        %1528 = vmatpush1.bf16.msra.mxu0 0
        %1529 = vmatprep.subr.bf16.mxu0 0
        %1530 = vmatpush1.bf16.msra.mxu0 0
        %1531 = vmatprep.subr.bf16.mxu0 0
        %1532 = vmatpush1.bf16.msra.mxu0 0
        %1533 = vmatprep.subr.bf16.mxu0 0
        %1534 = vmatpush1.bf16.msra.mxu0 0
        %1535 = vmatprep.subr.bf16.mxu0 0
        %1536 = vmatpush1.bf16.msra.mxu0 0
        %1537 = vmatprep.subr.bf16.mxu0 0
        %1538 = vmatpush1.bf16.msra.mxu0 0
        %1539 = vmatprep.subr.bf16.mxu0 0
        %1540 = vmatpush1.bf16.msra.mxu0 %v1523
        %1541 = vmatprep.subr.bf16.mxu0 0
        %1542 = vmatpush2.bf16.msra.mxu0 0
        %1543 = vmatprep.subr.bf16.mxu0 0
        %1544 = vmatpush2.bf16.msra.mxu0 0
        %1545 = vmatprep.subr.bf16.mxu0 0
        %1546 = vmatpush2.bf16.msra.mxu0 0
        %1547 = vmatprep.subr.bf16.mxu0 0
        %1548 = vmatpush2.bf16.msra.mxu0 0
        %1549 = vmatprep.subr.bf16.mxu0 0
        %1550 = vmatpush2.bf16.msra.mxu0 0
        %1551 = vmatprep.subr.bf16.mxu0 0
        %1552 = vmatpush2.bf16.msra.mxu0 0
        %1553 = vmatprep.subr.bf16.mxu0 0
        %1554 = vmatpush2.bf16.msra.mxu0 0
        %1555 = vmatprep.subr.bf16.mxu0 0
        %1556 = vmatpush2.bf16.msra.mxu0 0
        %1557 = vmatprep.mubr.bf16.mxu0 0
        %1558 = vmatmul.mubr.bf16.gmra.mxu0 %v1520
        %v1559 = vpop.f32.mrf.mxu0
        %v1560 = vadd.f32 0.0, %v1559
        %v1561 = vpop.f32.mrf.mxu0
        %v1562 = vpop.f32.mrf.mxu0
        %v1563 = vpop.f32.mrf.mxu0
        %1564 = vdwg.mxu0
        %v1566 = vsel %vm1235, %v1466, 0
        %v1569 = vsel %vm1475, %v1470, 0
        %1571 = vmatprep.subr.bf16.mxu0 0
        %1572 = vmatpush1.bf16.msra.mxu0 0
        %1573 = vmatprep.subr.bf16.mxu0 0
        %1574 = vmatpush1.bf16.msra.mxu0 0
        %1575 = vmatprep.subr.bf16.mxu0 0
        %1576 = vmatpush1.bf16.msra.mxu0 0
        %1577 = vmatprep.subr.bf16.mxu0 0
        %1578 = vmatpush1.bf16.msra.mxu0 0
        %1579 = vmatprep.subr.bf16.mxu0 0
        %1580 = vmatpush1.bf16.msra.mxu0 0
        %1581 = vmatprep.subr.bf16.mxu0 0
        %1582 = vmatpush1.bf16.msra.mxu0 0
        %1583 = vmatprep.subr.bf16.mxu0 0
        %1584 = vmatpush1.bf16.msra.mxu0 0
        %1585 = vmatprep.subr.bf16.mxu0 0
        %1586 = vmatpush1.bf16.msra.mxu0 %v1569
        %1587 = vmatprep.subr.bf16.mxu0 0
        %1588 = vmatpush2.bf16.msra.mxu0 0
        %1589 = vmatprep.subr.bf16.mxu0 0
        %1590 = vmatpush2.bf16.msra.mxu0 0
        %1591 = vmatprep.subr.bf16.mxu0 0
        %1592 = vmatpush2.bf16.msra.mxu0 0
        %1593 = vmatprep.subr.bf16.mxu0 0
        %1594 = vmatpush2.bf16.msra.mxu0 0
        %1595 = vmatprep.subr.bf16.mxu0 0
        %1596 = vmatpush2.bf16.msra.mxu0 0
        %1597 = vmatprep.subr.bf16.mxu0 0
        %1598 = vmatpush2.bf16.msra.mxu0 0
        %1599 = vmatprep.subr.bf16.mxu0 0
        %1600 = vmatpush2.bf16.msra.mxu0 0
        %1601 = vmatprep.subr.bf16.mxu0 0
        %1602 = vmatpush2.bf16.msra.mxu0 0
        %1603 = vmatprep.mubr.bf16.mxu0 0
        %1604 = vmatmul.mubr.bf16.gmra.mxu0 %v1566
        %v1605 = vpop.f32.mrf.mxu0
        %v1606 = vadd.f32 0.0, %v1605
        %v1607 = vpop.f32.mrf.mxu0
        %v1608 = vpop.f32.mrf.mxu0
        %v1609 = vpop.f32.mrf.mxu0
        %1610 = vdwg.mxu0
        %v1612 = vsel %vm1235, %v1467, 0
        %v1615 = vsel %vm1475, %v1471, 0
        %1617 = vmatprep.subr.bf16.mxu0 0
        %1618 = vmatpush1.bf16.msra.mxu0 0
        %1619 = vmatprep.subr.bf16.mxu0 0
        %1620 = vmatpush1.bf16.msra.mxu0 0
        %1621 = vmatprep.subr.bf16.mxu0 0
        %1622 = vmatpush1.bf16.msra.mxu0 0
        %1623 = vmatprep.subr.bf16.mxu0 0
        %1624 = vmatpush1.bf16.msra.mxu0 0
        %1625 = vmatprep.subr.bf16.mxu0 0
        %1626 = vmatpush1.bf16.msra.mxu0 0
        %1627 = vmatprep.subr.bf16.mxu0 0
        %1628 = vmatpush1.bf16.msra.mxu0 0
        %1629 = vmatprep.subr.bf16.mxu0 0
        %1630 = vmatpush1.bf16.msra.mxu0 0
        %1631 = vmatprep.subr.bf16.mxu0 0
        %1632 = vmatpush1.bf16.msra.mxu0 %v1615
        %1633 = vmatprep.subr.bf16.mxu0 0
        %1634 = vmatpush2.bf16.msra.mxu0 0
        %1635 = vmatprep.subr.bf16.mxu0 0
        %1636 = vmatpush2.bf16.msra.mxu0 0
        %1637 = vmatprep.subr.bf16.mxu0 0
        %1638 = vmatpush2.bf16.msra.mxu0 0
        %1639 = vmatprep.subr.bf16.mxu0 0
        %1640 = vmatpush2.bf16.msra.mxu0 0
        %1641 = vmatprep.subr.bf16.mxu0 0
        %1642 = vmatpush2.bf16.msra.mxu0 0
        %1643 = vmatprep.subr.bf16.mxu0 0
        %1644 = vmatpush2.bf16.msra.mxu0 0
        %1645 = vmatprep.subr.bf16.mxu0 0
        %1646 = vmatpush2.bf16.msra.mxu0 0
        %1647 = vmatprep.subr.bf16.mxu0 0
        %1648 = vmatpush2.bf16.msra.mxu0 0
        %1649 = vmatprep.mubr.bf16.mxu0 0
        %1650 = vmatmul.mubr.bf16.gmra.mxu0 %v1612
        %v1651 = vpop.f32.mrf.mxu0
        %v1652 = vadd.f32 0.0, %v1651
        %v1653 = vpop.f32.mrf.mxu0
        %v1654 = vpop.f32.mrf.mxu0
        %v1655 = vpop.f32.mrf.mxu0
        %1656 = vdwg.mxu0
        %v1657 = vpack.c.bf16 %v1514, %v1514
        %v1658 = vpack.c.bf16 %v1560, %v1560
        %v1659 = vpack.c.bf16 %v1606, %v1606
        %v1660 = vpack.c.bf16 %v1652, %v1652
        %v1661 = vld [vmem:[%s4] sm:$0xf]
        %v1662 = vld [vmem:[%s4 + $0x4] sm:$0xf]
        %v1663 = vld [vmem:[%s4 + $0x8] sm:$0xf]
        %v1664 = vld [vmem:[%s4 + $0xc] sm:$0xf]
        %v1666 = vsel %vm1235, %v1657, 0
        %v1669 = vsel %vm1475, %v1661, 0
        %1671 = vmatprep.subr.bf16.mxu0 0
        %1672 = vmatpush1.bf16.msra.mxu0 0
        %1673 = vmatprep.subr.bf16.mxu0 0
        %1674 = vmatpush1.bf16.msra.mxu0 0
        %1675 = vmatprep.subr.bf16.mxu0 0
        %1676 = vmatpush1.bf16.msra.mxu0 0
        %1677 = vmatprep.subr.bf16.mxu0 0
        %1678 = vmatpush1.bf16.msra.mxu0 0
        %1679 = vmatprep.subr.bf16.mxu0 0
        %1680 = vmatpush1.bf16.msra.mxu0 0
        %1681 = vmatprep.subr.bf16.mxu0 0
        %1682 = vmatpush1.bf16.msra.mxu0 0
        %1683 = vmatprep.subr.bf16.mxu0 0
        %1684 = vmatpush1.bf16.msra.mxu0 0
        %1685 = vmatprep.subr.bf16.mxu0 0
        %1686 = vmatpush1.bf16.msra.mxu0 %v1669
        %1687 = vmatprep.subr.bf16.mxu0 0
        %1688 = vmatpush2.bf16.msra.mxu0 0
        %1689 = vmatprep.subr.bf16.mxu0 0
        %1690 = vmatpush2.bf16.msra.mxu0 0
        %1691 = vmatprep.subr.bf16.mxu0 0
        %1692 = vmatpush2.bf16.msra.mxu0 0
        %1693 = vmatprep.subr.bf16.mxu0 0
        %1694 = vmatpush2.bf16.msra.mxu0 0
        %1695 = vmatprep.subr.bf16.mxu0 0
        %1696 = vmatpush2.bf16.msra.mxu0 0
        %1697 = vmatprep.subr.bf16.mxu0 0
        %1698 = vmatpush2.bf16.msra.mxu0 0
        %1699 = vmatprep.subr.bf16.mxu0 0
        %1700 = vmatpush2.bf16.msra.mxu0 0
        %1701 = vmatprep.subr.bf16.mxu0 0
        %1702 = vmatpush2.bf16.msra.mxu0 0
        %1703 = vmatprep.mubr.bf16.mxu0 0
        %1704 = vmatmul.mubr.bf16.gmra.mxu0 %v1666
        %v1705 = vpop.f32.mrf.mxu0
        %v1706 = vadd.f32 0.0, %v1705
        %v1707 = vpop.f32.mrf.mxu0
        %v1708 = vpop.f32.mrf.mxu0
        %v1709 = vpop.f32.mrf.mxu0
        %1710 = vdwg.mxu0
        %v1712 = vsel %vm1235, %v1658, 0
        %v1715 = vsel %vm1475, %v1662, 0
        %1717 = vmatprep.subr.bf16.mxu0 0
        %1718 = vmatpush1.bf16.msra.mxu0 0
        %1719 = vmatprep.subr.bf16.mxu0 0
        %1720 = vmatpush1.bf16.msra.mxu0 0
        %1721 = vmatprep.subr.bf16.mxu0 0
        %1722 = vmatpush1.bf16.msra.mxu0 0
        %1723 = vmatprep.subr.bf16.mxu0 0
        %1724 = vmatpush1.bf16.msra.mxu0 0
        %1725 = vmatprep.subr.bf16.mxu0 0
        %1726 = vmatpush1.bf16.msra.mxu0 0
        %1727 = vmatprep.subr.bf16.mxu0 0
        %1728 = vmatpush1.bf16.msra.mxu0 0
        %1729 = vmatprep.subr.bf16.mxu0 0
        %1730 = vmatpush1.bf16.msra.mxu0 0
        %1731 = vmatprep.subr.bf16.mxu0 0
        %1732 = vmatpush1.bf16.msra.mxu0 %v1715
        %1733 = vmatprep.subr.bf16.mxu0 0
        %1734 = vmatpush2.bf16.msra.mxu0 0
        %1735 = vmatprep.subr.bf16.mxu0 0
        %1736 = vmatpush2.bf16.msra.mxu0 0
        %1737 = vmatprep.subr.bf16.mxu0 0
        %1738 = vmatpush2.bf16.msra.mxu0 0
        %1739 = vmatprep.subr.bf16.mxu0 0
        %1740 = vmatpush2.bf16.msra.mxu0 0
        %1741 = vmatprep.subr.bf16.mxu0 0
        %1742 = vmatpush2.bf16.msra.mxu0 0
        %1743 = vmatprep.subr.bf16.mxu0 0
        %1744 = vmatpush2.bf16.msra.mxu0 0
        %1745 = vmatprep.subr.bf16.mxu0 0
        %1746 = vmatpush2.bf16.msra.mxu0 0
        %1747 = vmatprep.subr.bf16.mxu0 0
        %1748 = vmatpush2.bf16.msra.mxu0 0
        %1749 = vmatprep.mubr.bf16.mxu0 0
        %1750 = vmatmul.mubr.bf16.gmra.mxu0 %v1712
        %v1751 = vpop.f32.mrf.mxu0
        %v1752 = vadd.f32 0.0, %v1751
        %v1753 = vpop.f32.mrf.mxu0
        %v1754 = vpop.f32.mrf.mxu0
        %v1755 = vpop.f32.mrf.mxu0
        %1756 = vdwg.mxu0
        %v1758 = vsel %vm1235, %v1659, 0
        %v1761 = vsel %vm1475, %v1663, 0
        %1763 = vmatprep.subr.bf16.mxu0 0
        %1764 = vmatpush1.bf16.msra.mxu0 0
        %1765 = vmatprep.subr.bf16.mxu0 0
        %1766 = vmatpush1.bf16.msra.mxu0 0
        %1767 = vmatprep.subr.bf16.mxu0 0
        %1768 = vmatpush1.bf16.msra.mxu0 0
        %1769 = vmatprep.subr.bf16.mxu0 0
        %1770 = vmatpush1.bf16.msra.mxu0 0
        %1771 = vmatprep.subr.bf16.mxu0 0
        %1772 = vmatpush1.bf16.msra.mxu0 0
        %1773 = vmatprep.subr.bf16.mxu0 0
        %1774 = vmatpush1.bf16.msra.mxu0 0
        %1775 = vmatprep.subr.bf16.mxu0 0
        %1776 = vmatpush1.bf16.msra.mxu0 0
        %1777 = vmatprep.subr.bf16.mxu0 0
        %1778 = vmatpush1.bf16.msra.mxu0 %v1761
        %1779 = vmatprep.subr.bf16.mxu0 0
        %1780 = vmatpush2.bf16.msra.mxu0 0
        %1781 = vmatprep.subr.bf16.mxu0 0
        %1782 = vmatpush2.bf16.msra.mxu0 0
        %1783 = vmatprep.subr.bf16.mxu0 0
        %1784 = vmatpush2.bf16.msra.mxu0 0
        %1785 = vmatprep.subr.bf16.mxu0 0
        %1786 = vmatpush2.bf16.msra.mxu0 0
        %1787 = vmatprep.subr.bf16.mxu0 0
        %1788 = vmatpush2.bf16.msra.mxu0 0
        %1789 = vmatprep.subr.bf16.mxu0 0
        %1790 = vmatpush2.bf16.msra.mxu0 0
        %1791 = vmatprep.subr.bf16.mxu0 0
        %1792 = vmatpush2.bf16.msra.mxu0 0
        %1793 = vmatprep.subr.bf16.mxu0 0
        %1794 = vmatpush2.bf16.msra.mxu0 0
        %1795 = vmatprep.mubr.bf16.mxu0 0
        %1796 = vmatmul.mubr.bf16.gmra.mxu0 %v1758
        %v1797 = vpop.f32.mrf.mxu0
        %v1798 = vadd.f32 0.0, %v1797
        %v1799 = vpop.f32.mrf.mxu0
        %v1800 = vpop.f32.mrf.mxu0
        %v1801 = vpop.f32.mrf.mxu0
        %1802 = vdwg.mxu0
        %v1804 = vsel %vm1235, %v1660, 0
        %v1807 = vsel %vm1475, %v1664, 0
        %1809 = vmatprep.subr.bf16.mxu0 0
        %1810 = vmatpush1.bf16.msra.mxu0 0
        %1811 = vmatprep.subr.bf16.mxu0 0
        %1812 = vmatpush1.bf16.msra.mxu0 0
        %1813 = vmatprep.subr.bf16.mxu0 0
        %1814 = vmatpush1.bf16.msra.mxu0 0
        %1815 = vmatprep.subr.bf16.mxu0 0
        %1816 = vmatpush1.bf16.msra.mxu0 0
        %1817 = vmatprep.subr.bf16.mxu0 0
        %1818 = vmatpush1.bf16.msra.mxu0 0
        %1819 = vmatprep.subr.bf16.mxu0 0
        %1820 = vmatpush1.bf16.msra.mxu0 0
        %1821 = vmatprep.subr.bf16.mxu0 0
        %1822 = vmatpush1.bf16.msra.mxu0 0
        %1823 = vmatprep.subr.bf16.mxu0 0
        %1824 = vmatpush1.bf16.msra.mxu0 %v1807
        %1825 = vmatprep.subr.bf16.mxu0 0
        %1826 = vmatpush2.bf16.msra.mxu0 0
        %1827 = vmatprep.subr.bf16.mxu0 0
        %1828 = vmatpush2.bf16.msra.mxu0 0
        %1829 = vmatprep.subr.bf16.mxu0 0
        %1830 = vmatpush2.bf16.msra.mxu0 0
        %1831 = vmatprep.subr.bf16.mxu0 0
        %1832 = vmatpush2.bf16.msra.mxu0 0
        %1833 = vmatprep.subr.bf16.mxu0 0
        %1834 = vmatpush2.bf16.msra.mxu0 0
        %1835 = vmatprep.subr.bf16.mxu0 0
        %1836 = vmatpush2.bf16.msra.mxu0 0
        %1837 = vmatprep.subr.bf16.mxu0 0
        %1838 = vmatpush2.bf16.msra.mxu0 0
        %1839 = vmatprep.subr.bf16.mxu0 0
        %1840 = vmatpush2.bf16.msra.mxu0 0
        %1841 = vmatprep.mubr.bf16.mxu0 0
        %1842 = vmatmul.mubr.bf16.gmra.mxu0 %v1804
        %v1843 = vpop.f32.mrf.mxu0
        %v1844 = vadd.f32 0.0, %v1843
        %v1845 = vpop.f32.mrf.mxu0
        %v1846 = vpop.f32.mrf.mxu0
        %v1847 = vpop.f32.mrf.mxu0
        %1848 = vdwg.mxu0
        %v1849 = vsel %vm575, %v1706, 0.0
        %v1850 = vsel %vm575, %v1752, 0.0
        %v1851 = vadd.f32 %v1849, %v1850
        %v1852 = vsel %vm575, %v1798, 0.0
        %v1853 = vadd.f32 %v1851, %v1852
        %v1854 = vsel %vm575, %v1844, 0.0
        %v1855 = vadd.f32 %v1853, %v1854
        %v1856 = vadd.f32 %v545, %v1855
        %v1857 = vld [vmem:[%s5] sm:$0x1]
        %v1858 = vld [vmem:[%s6] sm:$0x1]
        %v1859 = vsel %vm575, %v1856, 0.0
        %1860 = vadd.xlane.f32.xlu0 %v1859
        %v1861 = vpop.xlane.xlu0 %1860
        %v1862 = vrcp.pop 32.0
        %v1863 = vmul.f32 %v1861, %v1862
        %v1864 = vsub.f32 %v1856, %v1863
        %v1865 = vmul.f32 %v1864, %v1864
        %v1866 = vsel %vm575, %v1865, 0.0
        %1867 = vadd.xlane.f32.xlu0 %v1866
        %v1868 = vpop.xlane.xlu0 %1867
        %v1869 = vmul.f32 %v1868, %v1862
        %v1870 = vadd.f32 %v1869, 1e-05
        %v1871 = vrsqrt.pop %v1870
        %v1872 = vmul.f32 %v1864, %v1871
        %v1874 = vlaneseq
        %v1875 = vshrl.u32 %v1874, 7
        %v1876 = vsub.s32 0, %v1875
        %v1877 = vrot.slane %v1857, %v1876
        %v1879 = vmul.f32 %v1872, %v1877
        %v1881 = vlaneseq
        %v1882 = vshrl.u32 %v1881, 7
        %v1883 = vsub.s32 0, %v1882
        %v1884 = vrot.slane %v1858, %v1883
        %v1886 = vadd.f32 %v1879, %v1884
        %v1887 = vld [vmem:[%s9] sm:$0x1]
        %v1888 = vld [vmem:[%s10] sm:$0x1]
        %v1889 = vsel %vm575, %v1886, 0.0
        %1890 = vadd.xlane.f32.xlu0 %v1889
        %v1891 = vpop.xlane.xlu0 %1890
        %v1892 = vmul.f32 %v1891, %v1862
        %v1893 = vsub.f32 %v1886, %v1892
        %v1894 = vmul.f32 %v1893, %v1893
        %v1895 = vsel %vm575, %v1894, 0.0
        %1896 = vadd.xlane.f32.xlu0 %v1895
        %v1897 = vpop.xlane.xlu0 %1896
        %v1898 = vmul.f32 %v1897, %v1862
        %v1899 = vadd.f32 %v1898, 1e-05
        %v1900 = vrsqrt.pop %v1899
        %v1901 = vmul.f32 %v1893, %v1900
        %v1903 = vlaneseq
        %v1904 = vshrl.u32 %v1903, 7
        %v1905 = vsub.s32 0, %v1904
        %v1906 = vrot.slane %v1887, %v1905
        %v1908 = vmul.f32 %v1901, %v1906
        %v1910 = vlaneseq
        %v1911 = vshrl.u32 %v1910, 7
        %v1912 = vsub.s32 0, %v1911
        %v1913 = vrot.slane %v1888, %v1912
        %v1915 = vadd.f32 %v1908, %v1913
        %v1916 = vpack.c.bf16 %v1915, %v1915
        %v1917 = vld [vmem:[%s11] sm:$0xf]
        %v1918 = vld [vmem:[%s11 + $0x4] sm:$0xf]
        %v1919 = vld [vmem:[%s11 + $0x8] sm:$0xf]
        %v1920 = vld [vmem:[%s11 + $0xc] sm:$0xf]
        %v1921 = vld [vmem:[%s12] sm:$0x1]
        %v1923 = vlaneseq
        %v1924 = vshrl.u32 %v1923, 7
        %v1925 = vsub.s32 0, %v1924
        %v1926 = vrot.slane %v1921, %v1925
        %v1932 = vunpack.c.l.b16 %v1917
        %v1933 = vunpack.c.l.b16 %v1918
        %v1934 = vunpack.c.l.b16 %v1919
        %v1935 = vunpack.c.l.b16 %v1920
        %v1936 = vpack.c.b16 %v1933, %v1932
        %v1937 = vpack.c.b16 %v1935, %v1934
        %v1941 = vsel %vm575, %v1916, 0
        %1943 = vmatprep.subr.bf16.mxu0 0
        %1944 = vmatpush1.bf16.msra.mxu0 0
        %1945 = vmatprep.subr.bf16.mxu0 0
        %1946 = vmatpush1.bf16.msra.mxu0 0
        %1947 = vmatprep.subr.bf16.mxu0 0
        %1948 = vmatpush1.bf16.msra.mxu0 0
        %1949 = vmatprep.subr.bf16.mxu0 0
        %1950 = vmatpush1.bf16.msra.mxu0 0
        %1951 = vmatprep.subr.bf16.mxu0 0
        %1952 = vmatpush1.bf16.msra.mxu0 0
        %1953 = vmatprep.subr.bf16.mxu0 0
        %1954 = vmatpush1.bf16.msra.mxu0 0
        %1955 = vmatprep.subr.bf16.mxu0 0
        %1956 = vmatpush1.bf16.msra.mxu0 %v1937
        %1957 = vmatprep.subr.bf16.mxu0 0
        %1958 = vmatpush1.bf16.msra.mxu0 %v1936
        %1959 = vmatprep.subr.bf16.mxu0 0
        %1960 = vmatpush2.bf16.msra.mxu0 0
        %1961 = vmatprep.subr.bf16.mxu0 0
        %1962 = vmatpush2.bf16.msra.mxu0 0
        %1963 = vmatprep.subr.bf16.mxu0 0
        %1964 = vmatpush2.bf16.msra.mxu0 0
        %1965 = vmatprep.subr.bf16.mxu0 0
        %1966 = vmatpush2.bf16.msra.mxu0 0
        %1967 = vmatprep.subr.bf16.mxu0 0
        %1968 = vmatpush2.bf16.msra.mxu0 0
        %1969 = vmatprep.subr.bf16.mxu0 0
        %1970 = vmatpush2.bf16.msra.mxu0 0
        %1971 = vmatprep.subr.bf16.mxu0 0
        %1972 = vmatpush2.bf16.msra.mxu0 0
        %1973 = vmatprep.subr.bf16.mxu0 0
        %1974 = vmatpush2.bf16.msra.mxu0 0
        %1975 = vmatprep.mubr.bf16.mxu0 0
        %1976 = vmatmul.mubr.bf16.gmra.mxu0 %v1941
        %v1977 = vpop.f32.mrf.mxu0
        %v1978 = vadd.f32 %v1926, %v1977
        %v1979 = vpop.f32.mrf.mxu0
        %v1980 = vpop.f32.mrf.mxu0
        %v1981 = vpop.f32.mrf.mxu0
        %1982 = vdwg.mxu0
        %v1983 = vmul.f32 %v1978, 0.5
        %v1984 = vmul.f32 %v1978, 0.70710677
        %v1985 = verf.f32.pop %v1984
        %v1986 = vadd.f32 %v1985, 1.0
        %v1987 = vmul.f32 %v1983, %v1986
        %v1988 = vld [vmem:[%s13] sm:$0x1]
        %v1989 = vld [vmem:[%s14] sm:$0x1]
        %1990 = vadd.xlane.f32.xlu0 %v1987
        %v1991 = vpop.xlane.xlu0 %1990
        %v1992 = vrcp.pop 128.0
        %v1993 = vmul.f32 %v1991, %v1992
        %v1994 = vsub.f32 %v1987, %v1993
        %v1995 = vmul.f32 %v1994, %v1994
        %1996 = vadd.xlane.f32.xlu0 %v1995
        %v1997 = vpop.xlane.xlu0 %1996
        %v1998 = vmul.f32 %v1997, %v1992
        %v1999 = vadd.f32 %v1998, 1e-05
        %v2000 = vrsqrt.pop %v1999
        %v2001 = vmul.f32 %v1994, %v2000
        %v2003 = vlaneseq
        %v2004 = vshrl.u32 %v2003, 7
        %v2005 = vsub.s32 0, %v2004
        %v2006 = vrot.slane %v1988, %v2005
        %v2008 = vmul.f32 %v2001, %v2006
        %v2010 = vlaneseq
        %v2011 = vshrl.u32 %v2010, 7
        %v2012 = vsub.s32 0, %v2011
        %v2013 = vrot.slane %v1989, %v2012
        %v2015 = vadd.f32 %v2008, %v2013
        %v2016 = vpack.c.bf16 %v2015, %v2015
        %v2017 = vld [vmem:[%s15] sm:$0xf]
        %v2018 = vld [vmem:[%s15 + $0x4] sm:$0xf]
        %v2019 = vld [vmem:[%s15 + $0x8] sm:$0xf]
        %v2020 = vld [vmem:[%s15 + $0xc] sm:$0xf]
        %v2021 = vld [vmem:[%s15 + $0x10] sm:$0xf]
        %v2022 = vld [vmem:[%s15 + $0x14] sm:$0xf]
        %v2023 = vld [vmem:[%s15 + $0x18] sm:$0xf]
        %v2024 = vld [vmem:[%s15 + $0x1c] sm:$0xf]
        %v2025 = vld [vmem:[%s15 + $0x20] sm:$0xf]
        %v2026 = vld [vmem:[%s15 + $0x24] sm:$0xf]
        %v2027 = vld [vmem:[%s15 + $0x28] sm:$0xf]
        %v2028 = vld [vmem:[%s15 + $0x2c] sm:$0xf]
        %v2029 = vld [vmem:[%s15 + $0x30] sm:$0xf]
        %v2030 = vld [vmem:[%s15 + $0x34] sm:$0xf]
        %v2031 = vld [vmem:[%s15 + $0x38] sm:$0xf]
        %v2032 = vld [vmem:[%s15 + $0x3c] sm:$0xf]
        %v2033 = vld [vmem:[%s16] sm:$0x1]
        %v2035 = vlaneseq
        %v2036 = vshrl.u32 %v2035, 7
        %v2037 = vsub.s32 0, %v2036
        %v2038 = vrot.slane %v2033, %v2037
        %v2056 = vunpack.c.l.b16 %v2017
        %v2057 = vunpack.c.l.b16 %v2018
        %v2058 = vunpack.c.l.b16 %v2019
        %v2059 = vunpack.c.l.b16 %v2020
        %v2060 = vunpack.c.l.b16 %v2021
        %v2061 = vunpack.c.l.b16 %v2022
        %v2062 = vunpack.c.l.b16 %v2023
        %v2063 = vunpack.c.l.b16 %v2024
        %v2064 = vunpack.c.l.b16 %v2025
        %v2065 = vunpack.c.l.b16 %v2026
        %v2066 = vunpack.c.l.b16 %v2027
        %v2067 = vunpack.c.l.b16 %v2028
        %v2068 = vunpack.c.l.b16 %v2029
        %v2069 = vunpack.c.l.b16 %v2030
        %v2070 = vunpack.c.l.b16 %v2031
        %v2071 = vunpack.c.l.b16 %v2032
        %v2072 = vpack.c.b16 %v2057, %v2056
        %v2073 = vpack.c.b16 %v2059, %v2058
        %v2074 = vpack.c.b16 %v2061, %v2060
        %v2075 = vpack.c.b16 %v2063, %v2062
        %v2076 = vpack.c.b16 %v2065, %v2064
        %v2077 = vpack.c.b16 %v2067, %v2066
        %v2078 = vpack.c.b16 %v2069, %v2068
        %v2079 = vpack.c.b16 %v2071, %v2070
        %2088 = vmatprep.subr.bf16.mxu0 0
        %2089 = vmatpush1.bf16.msra.mxu0 %v2079
        %2090 = vmatprep.subr.bf16.mxu0 0
        %2091 = vmatpush1.bf16.msra.mxu0 %v2078
        %2092 = vmatprep.subr.bf16.mxu0 0
        %2093 = vmatpush1.bf16.msra.mxu0 %v2077
        %2094 = vmatprep.subr.bf16.mxu0 0
        %2095 = vmatpush1.bf16.msra.mxu0 %v2076
        %2096 = vmatprep.subr.bf16.mxu0 0
        %2097 = vmatpush1.bf16.msra.mxu0 %v2075
        %2098 = vmatprep.subr.bf16.mxu0 0
        %2099 = vmatpush1.bf16.msra.mxu0 %v2074
        %2100 = vmatprep.subr.bf16.mxu0 0
        %2101 = vmatpush1.bf16.msra.mxu0 %v2073
        %2102 = vmatprep.subr.bf16.mxu0 0
        %2103 = vmatpush1.bf16.msra.mxu0 %v2072
        %2104 = vmatprep.subr.bf16.mxu0 0
        %2105 = vmatpush2.bf16.msra.mxu0 0
        %2106 = vmatprep.subr.bf16.mxu0 0
        %2107 = vmatpush2.bf16.msra.mxu0 0
        %2108 = vmatprep.subr.bf16.mxu0 0
        %2109 = vmatpush2.bf16.msra.mxu0 0
        %2110 = vmatprep.subr.bf16.mxu0 0
        %2111 = vmatpush2.bf16.msra.mxu0 0
        %2112 = vmatprep.subr.bf16.mxu0 0
        %2113 = vmatpush2.bf16.msra.mxu0 0
        %2114 = vmatprep.subr.bf16.mxu0 0
        %2115 = vmatpush2.bf16.msra.mxu0 0
        %2116 = vmatprep.subr.bf16.mxu0 0
        %2117 = vmatpush2.bf16.msra.mxu0 0
        %2118 = vmatprep.subr.bf16.mxu0 0
        %2119 = vmatpush2.bf16.msra.mxu0 0
        %2120 = vmatprep.mubr.bf16.mxu0 0
        %2121 = vmatmul.mubr.bf16.gmra.mxu0 %v2016
        %v2122 = vpop.f32.mrf.mxu0
        %v2123 = vadd.f32 %v2038, %v2122
        %v2124 = vpop.f32.mrf.mxu0
        %v2125 = vpop.f32.mrf.mxu0
        %v2126 = vpop.f32.mrf.mxu0
        %2127 = vdwg.mxu0
        %v2128 = vadd.f32 %v2123, %v1886
        %v2129 = vld [vmem:[%s7] sm:$0x1]
        %v2130 = vld [vmem:[%s8] sm:$0x1]
        %v2131 = vsel %vm575, %v2128, 0.0
        %2132 = vadd.xlane.f32.xlu0 %v2131
        %v2133 = vpop.xlane.xlu0 %2132
        %v2134 = vmul.f32 %v2133, %v1862
        %v2135 = vsub.f32 %v2128, %v2134
        %v2136 = vmul.f32 %v2135, %v2135
        %v2137 = vsel %vm575, %v2136, 0.0
        %2138 = vadd.xlane.f32.xlu0 %v2137
        %v2139 = vpop.xlane.xlu0 %2138
        %v2140 = vmul.f32 %v2139, %v1862
        %v2141 = vadd.f32 %v2140, 1e-05
        %v2142 = vrsqrt.pop %v2141
        %v2143 = vmul.f32 %v2135, %v2142
        %v2145 = vlaneseq
        %v2146 = vshrl.u32 %v2145, 7
        %v2147 = vsub.s32 0, %v2146
        %v2148 = vrot.slane %v2129, %v2147
        %v2150 = vmul.f32 %v2143, %v2148
        %v2152 = vlaneseq
        %v2153 = vshrl.u32 %v2152, 7
        %v2154 = vsub.s32 0, %v2153
        %v2155 = vrot.slane %v2130, %v2154
        %v2157 = vadd.f32 %v2150, %v2155
        %2158 = vst.msk [vmem:[%s539] sm:$0xff] %vm575, %v2157
        %s2159 = sand.u32 %s401, 1
        %s2160 = scalar_lea.sflag [#allocation3], %s2159
        %s2161 = sand.u32 %s401, 1
        %s2162 = smul.addr %s2161, 8
        %s2163 = scalar_lea.vmem [#allocation2], %s2162
        // Predicated region
        $region89: #{tpu_custom_call.1} parent=87 // pred_check
          %p2164 = pneg %p411
        $region90: #{tpu_custom_call.1} parent=87 // pred_check_branch
          %2166 = sbr.rel (%p2164) target = $region92
        $region91: #{tpu_custom_call.1} parent=87 // pred_region
          %s2168 = ssub.s32 128, 128
          %2169 = vsyncadd %s2160, %s2168
          %s2170 = smul.addr %s31, 128
          %s2171 = scalar_lea.hbm %s17, %s2170
          %s2173 = sshll.u32 %s2163, 4
          %s2174 = int_to_ptr.vmem [resolvable:$true] %s2173
          %2176 = dma.vmem_to_hbm [thread:$0]  %s2174, 128, %s2171, %s2160
        $region92: #{tpu_custom_call.1} parent=87 // pred_fallthru
          _
      $region88: #{tpu_custom_call.1} parent=5 // pred_fallthru
        _
      %p2177 = scmp.le.s32.totalorder 2, %s26
      // Predicated region
      $region93: #{tpu_custom_call.1} parent=5 // pred_check
        %p2178 = pneg %p2177
      $region94: #{tpu_custom_call.1} parent=5 // pred_check_branch
        %2180 = sbr.rel (%p2178) target = $region96
      $region95: #{tpu_custom_call.1} parent=5 // pred_region
        %s2181 = ssub.s32 %s26, 2
        // Predicated region
        $region97: #{tpu_custom_call.1} parent=95 // pred_check
          %p2182 = pneg %p417
        $region98: #{tpu_custom_call.1} parent=95 // pred_check_branch
          %2184 = sbr.rel (%p2182) target = $region100
        $region99: #{tpu_custom_call.1} parent=95 // pred_region
          %s2185 = sand.u32 %s402, 1
          %s2186 = scalar_lea.sflag [#allocation3], %s2185
          %s2187 = sand.u32 %s402, 1
          %s2188 = smul.addr %s2187, 8
          %s2189 = scalar_lea.vmem [#allocation2], %s2188
          %2190 = dma.done %s2186, 128
        $region100: #{tpu_custom_call.1} parent=95 // pred_fallthru
          _
      $region96: #{tpu_custom_call.1} parent=5 // pred_fallthru
        _
    $region6: #{tpu_custom_call.1} parent=1 // loop_footer
      %s30 = sadd.s32 1, %s26
    $region7: #{tpu_custom_call.1} parent=1 // loop_footer_branch
      %25 = sbr.rel target = $region3
    $region8: #{tpu_custom_call.1} parent=1 // loop_exit
      _
    %2191 = vsyncpa [#allocation3], 1
    %s2192 = scalar_lea.sflag [#allocation3], 1
    %2193 = vsyncpa %s2192, 1

</llo_original>
